<compile_context>
chip_gen: v7x
topology: tpu7x:2x2x1
jax: 0.10.0
libtpu: 0.0.40
codegen_flags: <defaults>
</compile_context>

<pallas_src>
import functools

import jax
import jax.numpy as jnp
from jax.experimental import pallas as pl
from jax.experimental.pallas import tpu as pltpu

_LANE = 128                   # lane width (feature / pair-index tiling unit)
_SUBLANE = 8                  # sublane width (batch tiling unit)
_MAX_TB = 32                  # max batch rows per grid step
_MAX_TJ = 512                 # max pair-index columns per grid step
_MAX_TILE_ELEMS = 8192        # cap on TB*TJ (bounds the fused slab below)
_CHUNK_BUDGET = 512 * 1024    # target f32 elems per fused (TB,TJ,ICHUNK) slab (~2 MiB)


def _round_up(v, m):
    return ((v + m - 1) // m) * m


def _pick_tiles(b, d):
    """Choose (tb, tj, dp, ichunk) for an input of shape (b, d)."""
    dp = _round_up(d, _LANE)

    # Batch tile: largest of (32, 16, 8) dividing b (fallback 8), so small /
    # awkward batches are not grossly over-padded with rows doing O(D^2) work.
    tb = _SUBLANE
    for cand in (_MAX_TB, 16, 8):
        if b % cand == 0:
            tb = cand
            break
    # Prefer at least two batch tiles so v7x's two TensorCores both get work
    # on the "parallel" axis (harmless on single-TC v5e/v6e).
    while tb > _SUBLANE and _round_up(b, tb) // tb < 2:
        tb //= 2

    # Pair-index tile: largest power-of-two multiple of 128 dividing dp,
    # capped so TB*TJ (and hence the fused slab) stays bounded.
    tj = _LANE
    for cand in (_MAX_TJ, 256):
        if dp % cand == 0 and tb * cand <= _MAX_TILE_ELEMS:
            tj = cand
            break

    # i-chunk for the in-kernel reduction loop: a multiple of 128 dividing dp,
    # sized so the fused (tb, tj, ichunk) intermediate is a few MiB at most.
    ichunk = (_CHUNK_BUDGET // (tb * tj)) // _LANE * _LANE
    ichunk = max(_LANE, min(dp, ichunk))
    while dp % ichunk != 0:
        ichunk -= _LANE
    return tb, tj, dp, ichunk


def _repulsion_kernel(x_ref, norm_ref, w_acc_ref, s_acc_ref, *,
                      strength, radius, d_valid, dp, tj, ichunk):
    j = pl.program_id(1)
    nj = pl.num_programs(1)

    @pl.when(j == 0)
    def _init():
        w_acc_ref[...] = jnp.zeros_like(w_acc_ref)
        s_acc_ref[...] = jnp.zeros_like(s_acc_ref)

    # Current tile of the pair index, sliced from the resident (TB, Dp) block.
    x_j = x_ref[:, pl.ds(pl.multiple_of(j * tj, _LANE), tj)]      # (TB, TJ)
    tb = x_j.shape[0]
    x_j3 = x_j[:, :, None]                                        # (TB, TJ, 1)

    # --- single pairwise pass: dist[b, p] = sum_i |x[b, p] - x[b, i]| --------
    # Reduced axis (i) sits on lanes -> XLU cross-lane reduce.  No per-element
    # padding mask (zero-padded i columns are corrected for afterwards).
    # Chunked over i so the fused sub->abs->reduce slab stays small for any D.
    n_chunks = dp // ichunk
    if n_chunks == 1:
        dist = jnp.sum(jnp.abs(x_j3 - x_ref[...][:, None, :]), axis=-1)
    else:
        def one_chunk(c, acc):
            i0 = pl.multiple_of(c * ichunk, _LANE)
            x_c = x_ref[:, pl.ds(i0, ichunk)]                     # (TB, ICHUNK)
            return acc + jnp.sum(jnp.abs(x_j3 - x_c[:, None, :]), axis=-1)

        dist = jax.lax.fori_loop(0, n_chunks, one_chunk,
                                 jnp.zeros((tb, tj), jnp.float32),
                                 unroll=n_chunks <= 8)

    # Each zero-padded i column contributed exactly |x_j|; subtract once.
    if d_valid != dp:
        dist = dist - jnp.float32(dp - d_valid) * jnp.abs(x_j)

    # Weights for this tile of the pair index (padded columns contribute 0).
    in_radius = dist < jnp.float32(radius)
    if d_valid != dp:
        col = jax.lax.broadcasted_iota(jnp.int32, (tb, tj), 1) + j * tj
        in_radius = jnp.logical_and(in_radius, col < d_valid)
    w_tile = jnp.where(in_radius, jnp.float32(strength), jnp.float32(0.0))

    # Accumulate W[b] = sum_i w[b,i] and S[b] = sum_i x[b,i] * w[b,i].
    w_acc_ref[...] += jnp.sum(w_tile, axis=-1, keepdims=True)            # (TB, 1)
    s_acc_ref[...] += jnp.sum(x_j * w_tile, axis=-1, keepdims=True)      # (TB, 1)

    # --- finalize on the last j tile: only O(B*D) work ------------------------
    @pl.when(j == nj - 1)
    def _finalize():
        off = s_acc_ref[...] - x_ref[...] * w_acc_ref[...]               # (TB, Dp)
        if d_valid != dp:
            lane = jax.lax.broadcasted_iota(jnp.int32, off.shape, 1)
            off = jnp.where(lane < d_valid, off, jnp.float32(0.0))
        norm_ref[...] = jnp.sqrt(jnp.sum(off * off, axis=-1, keepdims=True))


def repulsion_loss(x, strength=0.1, radius=2):
    x = jnp.asarray(x)
    b, d = x.shape
    tb, tj, dp, ichunk = _pick_tiles(b, d)
    bp = _round_up(b, tb)
    nb, nj = bp // tb, dp // tj

    # Pad / cast only when actually needed (the aligned-f32 case is free).
    if (bp, dp) == (b, d) and x.dtype == jnp.float32:
        xp = x
    else:
        xp = jnp.zeros((bp, dp), jnp.float32).at[:b, :d].set(x.astype(jnp.float32))

    kernel = functools.partial(
        _repulsion_kernel, strength=float(strength), radius=float(radius),
        d_valid=d, dp=dp, tj=tj, ichunk=ichunk)

    # TODO(synk): for nb == 1 (tiny batch, huge D) on v7x, split the j reduction
    # across the two TensorCores (per-core partial W/S combined in the epilogue)
    # instead of leaving one core idle.
    norms = pl.pallas_call(
        kernel,
        out_shape=jax.ShapeDtypeStruct((bp, 1), jnp.float32),
        grid_spec=pltpu.PrefetchScalarGridSpec(
            num_scalar_prefetch=0,
            grid=(nb, nj),
            in_specs=[
                # Full feature row; block index is constant over the j axis, so
                # it is fetched once per batch tile and stays resident in VMEM.
                pl.BlockSpec((tb, dp), lambda bi, ji: (bi, 0)),
            ],
            out_specs=pl.BlockSpec((tb, 1), lambda bi, ji: (bi, 0)),
            scratch_shapes=[pltpu.VMEM((tb, 1), jnp.float32),    # W accumulator
                            pltpu.VMEM((tb, 1), jnp.float32)],   # S accumulator
        ),
        compiler_params=pltpu.CompilerParams(
            dimension_semantics=("parallel", "arbitrary"),
            vmem_limit_bytes=48 * 1024 * 1024),
    )(xp)

    # Tiny O(B) epilogue (mean over the true batch rows) in plain JAX.
    return jnp.sum(norms[:b, 0]) / jnp.float32(b)


def _reference(x, strength, radius):
    # Pure-JAX mirror of the PyTorch forward, for verification.
    diff = x[:, :, None] - x[:, None, :]
    dist = jnp.abs(diff).sum(axis=1)
    w = (dist < radius).astype(jnp.float32) * strength
    off = (diff * w[:, :, None]).sum(axis=-2)
    return jnp.sqrt((off * off).sum(axis=-1)).mean()


if __name__ == "__main__":
    key = jax.random.PRNGKey(0)
    B, D = 4, 16
    # Scale chosen so pairwise L1 distances straddle the radius threshold,
    # exercising both branches of the (< radius) gate.
    x = 0.12 * jax.random.normal(key, (B, D), dtype=jnp.float32)

    loss = repulsion_loss(x, strength=0.1, radius=2)
    loss = jax.block_until_ready(loss)

    expected = _reference(x, 0.1, 2.0)
    assert jnp.allclose(loss, expected, rtol=1e-4, atol=1e-6), (loss, expected)
    print("KERNEL_OK")
</pallas_src>

<mosaic_0001>
module attributes {stable_mosaic.version = 11 : i64} {
  func.func @_repulsion_kernel(%arg0: i32, %arg1: i32, %arg2: memref<8x128xf32, #tpu.memory_space<vmem>>, %arg3: memref<8x1xf32, #tpu.memory_space<vmem>>, %arg4: memref<8x1xf32, #tpu.memory_space<vmem>>, %arg5: memref<8x1xf32, #tpu.memory_space<vmem>>) attributes {dimension_semantics = [#tpu.dimension_semantics<parallel>, #tpu.dimension_semantics<arbitrary>], iteration_bounds = array<i64: 1, 1>, scalar_prefetch = 0 : i64, scratch_operands = 2 : i64, tpu.core_type = #tpu.core_type<tc>, window_params = [{transform_indices = @transform_0, window_bounds = array<i64: 8, 128>}, {transform_indices = @transform_1, window_bounds = array<i64: 8, 1>}]} {
    %c0_i32 = arith.constant 0 : i32
    %0 = arith.cmpi eq, %arg1, %c0_i32 : i32
    %1 = arith.extui %0 : i1 to i32
    %c0_i32_0 = arith.constant 0 : i32
    %2 = arith.cmpi ne, %1, %c0_i32_0 : i32
    scf.if %2 {
      %cst_20 = arith.constant 0.000000e+00 : f32
      %45 = vector.broadcast %cst_20 : f32 to vector<8x1xf32>
      %c0_21 = arith.constant 0 : index
      %c0_22 = arith.constant 0 : index
      %46 = vector.load %arg4[%c0_21, %c0_22] : memref<8x1xf32, #tpu.memory_space<vmem>>, vector<8x1xf32>
      tpu.vector_store %arg4[%c0_21, %c0_22], %45 {strides = array<i32>} : memref<8x1xf32, #tpu.memory_space<vmem>>, vector<8x1xf32>,
      %cst_23 = arith.constant 0.000000e+00 : f32
      %47 = vector.broadcast %cst_23 : f32 to vector<8x1xf32>
      %c0_24 = arith.constant 0 : index
      %c0_25 = arith.constant 0 : index
      %48 = vector.load %arg5[%c0_24, %c0_25] : memref<8x1xf32, #tpu.memory_space<vmem>>, vector<8x1xf32>
      tpu.vector_store %arg5[%c0_24, %c0_25], %47 {strides = array<i32>} : memref<8x1xf32, #tpu.memory_space<vmem>>, vector<8x1xf32>,
    } else {
    }
    %c128_i32 = arith.constant 128 : i32
    %3 = arith.muli %arg1, %c128_i32 : i32
    %4 = tpu.assume_multiple %3, 128 : i32
    %c0 = arith.constant 0 : index
    %5 = arith.index_cast %4 : i32 to index
    %6 = vector.load %arg2[%c0, %5] : memref<8x128xf32, #tpu.memory_space<vmem>>, vector<8x128xf32>
    %7 = vector.shape_cast %6 : vector<8x128xf32> to vector<8x128x1xf32>
    %c0_1 = arith.constant 0 : index
    %c0_2 = arith.constant 0 : index
    %8 = vector.load %arg2[%c0_1, %c0_2] : memref<8x128xf32, #tpu.memory_space<vmem>>, vector<8x128xf32>
    %9 = vector.shape_cast %8 : vector<8x128xf32> to vector<8x1x128xf32>
    %10 = vector.broadcast %7 : vector<8x128x1xf32> to vector<8x128x128xf32>
    %11 = vector.broadcast %9 : vector<8x1x128xf32> to vector<8x128x128xf32>
    %12 = arith.subf %10, %11 : vector<8x128x128xf32>
    %13 = math.absf %12 : vector<8x128x128xf32>
    %cst = arith.constant dense<0.000000e+00> : vector<8x128xf32>
    %14 = vector.multi_reduction <add>, %13, %cst [2] : vector<8x128x128xf32> to vector<8x128xf32>
    %15 = math.absf %6 : vector<8x128xf32>
    %cst_3 = arith.constant 1.120000e+02 : f32
    %16 = vector.broadcast %cst_3 : f32 to vector<8x128xf32>
    %17 = arith.mulf %16, %15 : vector<8x128xf32>
    %18 = arith.subf %14, %17 : vector<8x128xf32>
    %cst_4 = arith.constant 2.000000e+00 : f32
    %19 = vector.broadcast %cst_4 : f32 to vector<8x128xf32>
    %20 = arith.cmpf olt, %18, %19 : vector<8x128xf32>
    %21 = tpu.iota {dimensions = array<i32: 1>} : vector<8x128xi32>
    %c128_i32_5 = arith.constant 128 : i32
    %22 = arith.muli %arg1, %c128_i32_5 : i32
    %23 = vector.broadcast %22 : i32 to vector<8x128xi32>
    %24 = arith.addi %21, %23 : vector<8x128xi32>
    %c16_i32 = arith.constant 16 : i32
    %25 = vector.broadcast %c16_i32 : i32 to vector<8x128xi32>
    %26 = arith.cmpi slt, %24, %25 : vector<8x128xi32>
    %27 = arith.andi %20, %26 : vector<8x128xi1>
    %cst_6 = arith.constant 1.000000e-01 : f32
    %cst_7 = arith.constant 0.000000e+00 : f32
    %28 = vector.broadcast %cst_6 : f32 to vector<8x128xf32>
    %29 = vector.broadcast %cst_7 : f32 to vector<8x128xf32>
    %30 = arith.select %27, %28, %29 : vector<8x128xi1>, vector<8x128xf32>
    %c0_8 = arith.constant 0 : index
    %c0_9 = arith.constant 0 : index
    %31 = vector.load %arg4[%c0_8, %c0_9] : memref<8x1xf32, #tpu.memory_space<vmem>>, vector<8x1xf32>
    %cst_10 = arith.constant dense<0.000000e+00> : vector<8xf32>
    %32 = vector.multi_reduction <add>, %30, %cst_10 [1] : vector<8x128xf32> to vector<8xf32>
    %33 = vector.shape_cast %32 : vector<8xf32> to vector<8x1xf32>
    %34 = arith.addf %31, %33 : vector<8x1xf32>
    %c0_11 = arith.constant 0 : index
    %c0_12 = arith.constant 0 : index
    %35 = vector.load %arg4[%c0_11, %c0_12] : memref<8x1xf32, #tpu.memory_space<vmem>>, vector<8x1xf32>
    tpu.vector_store %arg4[%c0_11, %c0_12], %34 {strides = array<i32>} : memref<8x1xf32, #tpu.memory_space<vmem>>, vector<8x1xf32>,
    %c0_13 = arith.constant 0 : index
    %c0_14 = arith.constant 0 : index
    %36 = vector.load %arg5[%c0_13, %c0_14] : memref<8x1xf32, #tpu.memory_space<vmem>>, vector<8x1xf32>
    %37 = arith.mulf %6, %30 : vector<8x128xf32>
    %cst_15 = arith.constant dense<0.000000e+00> : vector<8xf32>
    %38 = vector.multi_reduction <add>, %37, %cst_15 [1] : vector<8x128xf32> to vector<8xf32>
    %39 = vector.shape_cast %38 : vector<8xf32> to vector<8x1xf32>
    %40 = arith.addf %36, %39 : vector<8x1xf32>
    %c0_16 = arith.constant 0 : index
    %c0_17 = arith.constant 0 : index
    %41 = vector.load %arg5[%c0_16, %c0_17] : memref<8x1xf32, #tpu.memory_space<vmem>>, vector<8x1xf32>
    tpu.vector_store %arg5[%c0_16, %c0_17], %40 {strides = array<i32>} : memref<8x1xf32, #tpu.memory_space<vmem>>, vector<8x1xf32>,
    %c0_i32_18 = arith.constant 0 : i32
    %42 = arith.cmpi eq, %arg1, %c0_i32_18 : i32
    %43 = arith.extui %42 : i1 to i32
    %c0_i32_19 = arith.constant 0 : i32
    %44 = arith.cmpi ne, %43, %c0_i32_19 : i32
    scf.if %44 {
      %c0_20 = arith.constant 0 : index
      %c0_21 = arith.constant 0 : index
      %45 = vector.load %arg5[%c0_20, %c0_21] : memref<8x1xf32, #tpu.memory_space<vmem>>, vector<8x1xf32>
      %c0_22 = arith.constant 0 : index
      %c0_23 = arith.constant 0 : index
      %46 = vector.load %arg2[%c0_22, %c0_23] : memref<8x128xf32, #tpu.memory_space<vmem>>, vector<8x128xf32>
      %c0_24 = arith.constant 0 : index
      %c0_25 = arith.constant 0 : index
      %47 = vector.load %arg4[%c0_24, %c0_25] : memref<8x1xf32, #tpu.memory_space<vmem>>, vector<8x1xf32>
      %48 = vector.broadcast %47 : vector<8x1xf32> to vector<8x128xf32>
      %49 = arith.mulf %46, %48 : vector<8x128xf32>
      %50 = vector.broadcast %45 : vector<8x1xf32> to vector<8x128xf32>
      %51 = arith.subf %50, %49 : vector<8x128xf32>
      %52 = tpu.iota {dimensions = array<i32: 1>} : vector<8x128xi32>
      %c16_i32_26 = arith.constant 16 : i32
      %53 = vector.broadcast %c16_i32_26 : i32 to vector<8x128xi32>
      %54 = arith.cmpi slt, %52, %53 : vector<8x128xi32>
      %cst_27 = arith.constant 0.000000e+00 : f32
      %55 = vector.broadcast %cst_27 : f32 to vector<8x128xf32>
      %56 = arith.select %54, %51, %55 : vector<8x128xi1>, vector<8x128xf32>
      %57 = arith.mulf %56, %56 : vector<8x128xf32>
      %cst_28 = arith.constant dense<0.000000e+00> : vector<8xf32>
      %58 = vector.multi_reduction <add>, %57, %cst_28 [1] : vector<8x128xf32> to vector<8xf32>
      %59 = vector.shape_cast %58 : vector<8xf32> to vector<8x1xf32>
      %60 = math.sqrt %59 : vector<8x1xf32>
      %c0_29 = arith.constant 0 : index
      %c0_30 = arith.constant 0 : index
      %61 = vector.load %arg3[%c0_29, %c0_30] : memref<8x1xf32, #tpu.memory_space<vmem>>, vector<8x1xf32>
      tpu.vector_store %arg3[%c0_29, %c0_30], %60 {strides = array<i32>} : memref<8x1xf32, #tpu.memory_space<vmem>>, vector<8x1xf32>,
    } else {
    }
    return
  }
  func.func @transform_0(%arg0: i32, %arg1: i32) -> (i32, i32) {
    %c0_i32 = arith.constant 0 : i32
    %c0_i32_0 = arith.constant 0 : i32
    return %arg0, %c0_i32 : i32, i32
  }
  func.func @transform_1(%arg0: i32, %arg1: i32) -> (i32, i32) {
    %c0_i32 = arith.constant 0 : i32
    %c0_i32_0 = arith.constant 0 : i32
    return %arg0, %c0_i32 : i32, i32
  }
}

</mosaic_0001>

<llo_original>
// kernel: tpu_custom_call.1
$region0: #{tpu_custom_call.1}
  #allocation0 [shape = 'u32[]', space=smem, size = 0x4, offset = 0x4, fixed_abs, tag = 'smem constant byte address 0x4 - core index']
  #allocation1 [shape = 'u32[144,128]{1,0:T(1,128)}', space=vmem, size = 0x12000, scoped, tag = 'internal scratch']
  #allocation2 [shape = 'f32[8,1]{1,0:T(8,128)}', space=vmem, size = 0x1000, scoped, tag = 'scratch operand']
  #allocation3 [shape = 'f32[8,1]{1,0:T(8,128)}', space=vmem, size = 0x1000, scoped, tag = 'scratch operand']
  %s0 = inlined_call_operand.hbm [shape: f32[8,128], index: 0, kind: input, shape index: {}]
  %s1 = inlined_call_operand.vmem [shape: f32[8,1], index: 1, kind: output, shape index: {}]
  %s2 = sld [smem:[#allocation0]]
  $region26: #{tpu_custom_call.1} parent=0
    _
  %s4 = ssub.s32 1, %s2
  %s5 = scalar_select 0, %s4, %s2
  $region1: #{tpu_custom_call.1} parent=0
    #allocation4 [shape = 'u8[4096]{0}', space=vmem, size = 0x1000, scoped, tag = 'input window, operand 0, single buffered']
    #allocation5 [shape = 's32[1]{0}', space=sflag, size = 0x4, scoped, tag = 'scoped memory for tpu_custom_call.1']
    %6 = vsyncpa [#allocation5], 0
    // Predicated region
    $region2: #{tpu_custom_call.1} parent=1 // pred_check
      _
    $region3: #{tpu_custom_call.1} parent=1 // pred_check_branch
      %8 = sbr.rel (0) target = $region5
    $region4: #{tpu_custom_call.1} parent=1 // pred_region
      %s10 = ssub.s32 128, 128
      %11 = vsyncadd [#allocation5], %s10
      %s13 = sshll.u32 [#allocation4], 4
      %s14 = int_to_ptr.vmem [resolvable:$true] %s13
      %16 = dma.hbm_to_vmem [thread:$0]  %s0, 128, %s14, [#allocation5]
    $region5: #{tpu_custom_call.1} parent=1 // pred_fallthru
      _
    // Predicated region
    $region6: #{tpu_custom_call.1} parent=1 // pred_check
      _
    $region7: #{tpu_custom_call.1} parent=1 // pred_check_branch
      %18 = sbr.rel (0) target = $region9
    $region8: #{tpu_custom_call.1} parent=1 // pred_region
      %19 = dma.done [#allocation5], 128
    $region9: #{tpu_custom_call.1} parent=1 // pred_fallthru
      _
    %p20 = scmp.eq.s32.totalorder 0, 0
    // Predicated region
    $region10: #{tpu_custom_call.1} parent=1 // pred_check
      %p21 = pneg %p20
    $region11: #{tpu_custom_call.1} parent=1 // pred_check_branch
      %23 = sbr.rel (%p21) target = $region13
    $region12: #{tpu_custom_call.1} parent=1 // pred_region
      %vm24 = vcmask 7168
      %25 = vst.msk [vmem:[#allocation2] sm:$0xff] %vm24, 0.0
      %26 = vst.msk [vmem:[#allocation3] sm:$0xff] %vm24, 0.0
    $region13: #{tpu_custom_call.1} parent=1 // pred_fallthru
      _
    %s27 = smul.u32 0, 128
    %s28 = sshra.s32 %s27, 7
    %s29 = sand.u32 %s27, 127
    %s30 = scalar_lea.vmem [#allocation4], %s28
    %v31 = vld [vmem:[%s30] sm:$0xff]
    %v32 = vlaneseq
    %v33 = vshrl.u32 %v32, 7
    %v34 = vsub.s32 0, %v33
    %v35 = vrot.slane %v31, %v34
    %37 = vbcast.lane.b32.xlu0 %v35, 256
    %v38 = vpop.permute.xlu0 %37
    %s40 = sor.u32 256, 8
    %41 = vbcast.lane.b32.xlu0 %v35, %s40
    %v42 = vpop.permute.xlu0 %41
    %s44 = sor.u32 256, 16
    %45 = vbcast.lane.b32.xlu0 %v35, %s44
    %v46 = vpop.permute.xlu0 %45
    %s48 = sor.u32 256, 24
    %49 = vbcast.lane.b32.xlu0 %v35, %s48
    %v50 = vpop.permute.xlu0 %49
    %s52 = sor.u32 256, 32
    %53 = vbcast.lane.b32.xlu0 %v35, %s52
    %v54 = vpop.permute.xlu0 %53
    %s56 = sor.u32 256, 40
    %57 = vbcast.lane.b32.xlu0 %v35, %s56
    %v58 = vpop.permute.xlu0 %57
    %s60 = sor.u32 256, 48
    %61 = vbcast.lane.b32.xlu0 %v35, %s60
    %v62 = vpop.permute.xlu0 %61
    %s64 = sor.u32 256, 56
    %65 = vbcast.lane.b32.xlu0 %v35, %s64
    %v66 = vpop.permute.xlu0 %65
    %s68 = sor.u32 256, 64
    %69 = vbcast.lane.b32.xlu0 %v35, %s68
    %v70 = vpop.permute.xlu0 %69
    %s72 = sor.u32 256, 72
    %73 = vbcast.lane.b32.xlu0 %v35, %s72
    %v74 = vpop.permute.xlu0 %73
    %s76 = sor.u32 256, 80
    %77 = vbcast.lane.b32.xlu0 %v35, %s76
    %v78 = vpop.permute.xlu0 %77
    %s80 = sor.u32 256, 88
    %81 = vbcast.lane.b32.xlu0 %v35, %s80
    %v82 = vpop.permute.xlu0 %81
    %s84 = sor.u32 256, 96
    %85 = vbcast.lane.b32.xlu0 %v35, %s84
    %v86 = vpop.permute.xlu0 %85
    %s88 = sor.u32 256, 104
    %89 = vbcast.lane.b32.xlu0 %v35, %s88
    %v90 = vpop.permute.xlu0 %89
    %s92 = sor.u32 256, 112
    %93 = vbcast.lane.b32.xlu0 %v35, %s92
    %v94 = vpop.permute.xlu0 %93
    %s96 = sor.u32 256, 120
    %97 = vbcast.lane.b32.xlu0 %v35, %s96
    %v98 = vpop.permute.xlu0 %97
    %v99 = vlaneseq
    %v100 = vshrl.u32 %v99, 7
    %v101 = vsub.s32 1, %v100
    %v102 = vrot.slane %v31, %v101
    %104 = vbcast.lane.b32.xlu0 %v102, 256
    %v105 = vpop.permute.xlu0 %104
    %s107 = sor.u32 256, 8
    %108 = vbcast.lane.b32.xlu0 %v102, %s107
    %v109 = vpop.permute.xlu0 %108
    %s111 = sor.u32 256, 16
    %112 = vbcast.lane.b32.xlu0 %v102, %s111
    %v113 = vpop.permute.xlu0 %112
    %s115 = sor.u32 256, 24
    %116 = vbcast.lane.b32.xlu0 %v102, %s115
    %v117 = vpop.permute.xlu0 %116
    %s119 = sor.u32 256, 32
    %120 = vbcast.lane.b32.xlu0 %v102, %s119
    %v121 = vpop.permute.xlu0 %120
    %s123 = sor.u32 256, 40
    %124 = vbcast.lane.b32.xlu0 %v102, %s123
    %v125 = vpop.permute.xlu0 %124
    %s127 = sor.u32 256, 48
    %128 = vbcast.lane.b32.xlu0 %v102, %s127
    %v129 = vpop.permute.xlu0 %128
    %s131 = sor.u32 256, 56
    %132 = vbcast.lane.b32.xlu0 %v102, %s131
    %v133 = vpop.permute.xlu0 %132
    %s135 = sor.u32 256, 64
    %136 = vbcast.lane.b32.xlu0 %v102, %s135
    %v137 = vpop.permute.xlu0 %136
    %s139 = sor.u32 256, 72
    %140 = vbcast.lane.b32.xlu0 %v102, %s139
    %v141 = vpop.permute.xlu0 %140
    %s143 = sor.u32 256, 80
    %144 = vbcast.lane.b32.xlu0 %v102, %s143
    %v145 = vpop.permute.xlu0 %144
    %s147 = sor.u32 256, 88
    %148 = vbcast.lane.b32.xlu0 %v102, %s147
    %v149 = vpop.permute.xlu0 %148
    %s151 = sor.u32 256, 96
    %152 = vbcast.lane.b32.xlu0 %v102, %s151
    %v153 = vpop.permute.xlu0 %152
    %s155 = sor.u32 256, 104
    %156 = vbcast.lane.b32.xlu0 %v102, %s155
    %v157 = vpop.permute.xlu0 %156
    %s159 = sor.u32 256, 112
    %160 = vbcast.lane.b32.xlu0 %v102, %s159
    %v161 = vpop.permute.xlu0 %160
    %s163 = sor.u32 256, 120
    %164 = vbcast.lane.b32.xlu0 %v102, %s163
    %v165 = vpop.permute.xlu0 %164
    %v166 = vlaneseq
    %v167 = vshrl.u32 %v166, 7
    %v168 = vsub.s32 2, %v167
    %v169 = vrot.slane %v31, %v168
    %171 = vbcast.lane.b32.xlu0 %v169, 256
    %v172 = vpop.permute.xlu0 %171
    %s174 = sor.u32 256, 8
    %175 = vbcast.lane.b32.xlu0 %v169, %s174
    %v176 = vpop.permute.xlu0 %175
    %s178 = sor.u32 256, 16
    %179 = vbcast.lane.b32.xlu0 %v169, %s178
    %v180 = vpop.permute.xlu0 %179
    %s182 = sor.u32 256, 24
    %183 = vbcast.lane.b32.xlu0 %v169, %s182
    %v184 = vpop.permute.xlu0 %183
    %s186 = sor.u32 256, 32
    %187 = vbcast.lane.b32.xlu0 %v169, %s186
    %v188 = vpop.permute.xlu0 %187
    %s190 = sor.u32 256, 40
    %191 = vbcast.lane.b32.xlu0 %v169, %s190
    %v192 = vpop.permute.xlu0 %191
    %s194 = sor.u32 256, 48
    %195 = vbcast.lane.b32.xlu0 %v169, %s194
    %v196 = vpop.permute.xlu0 %195
    %s198 = sor.u32 256, 56
    %199 = vbcast.lane.b32.xlu0 %v169, %s198
    %v200 = vpop.permute.xlu0 %199
    %s202 = sor.u32 256, 64
    %203 = vbcast.lane.b32.xlu0 %v169, %s202
    %v204 = vpop.permute.xlu0 %203
    %s206 = sor.u32 256, 72
    %207 = vbcast.lane.b32.xlu0 %v169, %s206
    %v208 = vpop.permute.xlu0 %207
    %s210 = sor.u32 256, 80
    %211 = vbcast.lane.b32.xlu0 %v169, %s210
    %v212 = vpop.permute.xlu0 %211
    %s214 = sor.u32 256, 88
    %215 = vbcast.lane.b32.xlu0 %v169, %s214
    %v216 = vpop.permute.xlu0 %215
    %s218 = sor.u32 256, 96
    %219 = vbcast.lane.b32.xlu0 %v169, %s218
    %v220 = vpop.permute.xlu0 %219
    %s222 = sor.u32 256, 104
    %223 = vbcast.lane.b32.xlu0 %v169, %s222
    %v224 = vpop.permute.xlu0 %223
    %s226 = sor.u32 256, 112
    %227 = vbcast.lane.b32.xlu0 %v169, %s226
    %v228 = vpop.permute.xlu0 %227
    %s230 = sor.u32 256, 120
    %231 = vbcast.lane.b32.xlu0 %v169, %s230
    %v232 = vpop.permute.xlu0 %231
    %v233 = vlaneseq
    %v234 = vshrl.u32 %v233, 7
    %v235 = vsub.s32 3, %v234
    %v236 = vrot.slane %v31, %v235
    %238 = vbcast.lane.b32.xlu0 %v236, 256
    %v239 = vpop.permute.xlu0 %238
    %s241 = sor.u32 256, 8
    %242 = vbcast.lane.b32.xlu0 %v236, %s241
    %v243 = vpop.permute.xlu0 %242
    %s245 = sor.u32 256, 16
    %246 = vbcast.lane.b32.xlu0 %v236, %s245
    %v247 = vpop.permute.xlu0 %246
    %s249 = sor.u32 256, 24
    %250 = vbcast.lane.b32.xlu0 %v236, %s249
    %v251 = vpop.permute.xlu0 %250
    %s253 = sor.u32 256, 32
    %254 = vbcast.lane.b32.xlu0 %v236, %s253
    %v255 = vpop.permute.xlu0 %254
    %s257 = sor.u32 256, 40
    %258 = vbcast.lane.b32.xlu0 %v236, %s257
    %v259 = vpop.permute.xlu0 %258
    %s261 = sor.u32 256, 48
    %262 = vbcast.lane.b32.xlu0 %v236, %s261
    %v263 = vpop.permute.xlu0 %262
    %s265 = sor.u32 256, 56
    %266 = vbcast.lane.b32.xlu0 %v236, %s265
    %v267 = vpop.permute.xlu0 %266
    %s269 = sor.u32 256, 64
    %270 = vbcast.lane.b32.xlu0 %v236, %s269
    %v271 = vpop.permute.xlu0 %270
    %s273 = sor.u32 256, 72
    %274 = vbcast.lane.b32.xlu0 %v236, %s273
    %v275 = vpop.permute.xlu0 %274
    %s277 = sor.u32 256, 80
    %278 = vbcast.lane.b32.xlu0 %v236, %s277
    %v279 = vpop.permute.xlu0 %278
    %s281 = sor.u32 256, 88
    %282 = vbcast.lane.b32.xlu0 %v236, %s281
    %v283 = vpop.permute.xlu0 %282
    %s285 = sor.u32 256, 96
    %286 = vbcast.lane.b32.xlu0 %v236, %s285
    %v287 = vpop.permute.xlu0 %286
    %s289 = sor.u32 256, 104
    %290 = vbcast.lane.b32.xlu0 %v236, %s289
    %v291 = vpop.permute.xlu0 %290
    %s293 = sor.u32 256, 112
    %294 = vbcast.lane.b32.xlu0 %v236, %s293
    %v295 = vpop.permute.xlu0 %294
    %s297 = sor.u32 256, 120
    %298 = vbcast.lane.b32.xlu0 %v236, %s297
    %v299 = vpop.permute.xlu0 %298
    %v300 = vlaneseq
    %v301 = vshrl.u32 %v300, 7
    %v302 = vsub.s32 4, %v301
    %v303 = vrot.slane %v31, %v302
    %305 = vbcast.lane.b32.xlu0 %v303, 256
    %v306 = vpop.permute.xlu0 %305
    %s308 = sor.u32 256, 8
    %309 = vbcast.lane.b32.xlu0 %v303, %s308
    %v310 = vpop.permute.xlu0 %309
    %s312 = sor.u32 256, 16
    %313 = vbcast.lane.b32.xlu0 %v303, %s312
    %v314 = vpop.permute.xlu0 %313
    %s316 = sor.u32 256, 24
    %317 = vbcast.lane.b32.xlu0 %v303, %s316
    %v318 = vpop.permute.xlu0 %317
    %s320 = sor.u32 256, 32
    %321 = vbcast.lane.b32.xlu0 %v303, %s320
    %v322 = vpop.permute.xlu0 %321
    %s324 = sor.u32 256, 40
    %325 = vbcast.lane.b32.xlu0 %v303, %s324
    %v326 = vpop.permute.xlu0 %325
    %s328 = sor.u32 256, 48
    %329 = vbcast.lane.b32.xlu0 %v303, %s328
    %v330 = vpop.permute.xlu0 %329
    %s332 = sor.u32 256, 56
    %333 = vbcast.lane.b32.xlu0 %v303, %s332
    %v334 = vpop.permute.xlu0 %333
    %s336 = sor.u32 256, 64
    %337 = vbcast.lane.b32.xlu0 %v303, %s336
    %v338 = vpop.permute.xlu0 %337
    %s340 = sor.u32 256, 72
    %341 = vbcast.lane.b32.xlu0 %v303, %s340
    %v342 = vpop.permute.xlu0 %341
    %s344 = sor.u32 256, 80
    %345 = vbcast.lane.b32.xlu0 %v303, %s344
    %v346 = vpop.permute.xlu0 %345
    %s348 = sor.u32 256, 88
    %349 = vbcast.lane.b32.xlu0 %v303, %s348
    %v350 = vpop.permute.xlu0 %349
    %s352 = sor.u32 256, 96
    %353 = vbcast.lane.b32.xlu0 %v303, %s352
    %v354 = vpop.permute.xlu0 %353
    %s356 = sor.u32 256, 104
    %357 = vbcast.lane.b32.xlu0 %v303, %s356
    %v358 = vpop.permute.xlu0 %357
    %s360 = sor.u32 256, 112
    %361 = vbcast.lane.b32.xlu0 %v303, %s360
    %v362 = vpop.permute.xlu0 %361
    %s364 = sor.u32 256, 120
    %365 = vbcast.lane.b32.xlu0 %v303, %s364
    %v366 = vpop.permute.xlu0 %365
    %v367 = vlaneseq
    %v368 = vshrl.u32 %v367, 7
    %v369 = vsub.s32 5, %v368
    %v370 = vrot.slane %v31, %v369
    %372 = vbcast.lane.b32.xlu0 %v370, 256
    %v373 = vpop.permute.xlu0 %372
    %s375 = sor.u32 256, 8
    %376 = vbcast.lane.b32.xlu0 %v370, %s375
    %v377 = vpop.permute.xlu0 %376
    %s379 = sor.u32 256, 16
    %380 = vbcast.lane.b32.xlu0 %v370, %s379
    %v381 = vpop.permute.xlu0 %380
    %s383 = sor.u32 256, 24
    %384 = vbcast.lane.b32.xlu0 %v370, %s383
    %v385 = vpop.permute.xlu0 %384
    %s387 = sor.u32 256, 32
    %388 = vbcast.lane.b32.xlu0 %v370, %s387
    %v389 = vpop.permute.xlu0 %388
    %s391 = sor.u32 256, 40
    %392 = vbcast.lane.b32.xlu0 %v370, %s391
    %v393 = vpop.permute.xlu0 %392
    %s395 = sor.u32 256, 48
    %396 = vbcast.lane.b32.xlu0 %v370, %s395
    %v397 = vpop.permute.xlu0 %396
    %s399 = sor.u32 256, 56
    %400 = vbcast.lane.b32.xlu0 %v370, %s399
    %v401 = vpop.permute.xlu0 %400
    %s403 = sor.u32 256, 64
    %404 = vbcast.lane.b32.xlu0 %v370, %s403
    %v405 = vpop.permute.xlu0 %404
    %s407 = sor.u32 256, 72
    %408 = vbcast.lane.b32.xlu0 %v370, %s407
    %v409 = vpop.permute.xlu0 %408
    %s411 = sor.u32 256, 80
    %412 = vbcast.lane.b32.xlu0 %v370, %s411
    %v413 = vpop.permute.xlu0 %412
    %s415 = sor.u32 256, 88
    %416 = vbcast.lane.b32.xlu0 %v370, %s415
    %v417 = vpop.permute.xlu0 %416
    %s419 = sor.u32 256, 96
    %420 = vbcast.lane.b32.xlu0 %v370, %s419
    %v421 = vpop.permute.xlu0 %420
    %s423 = sor.u32 256, 104
    %424 = vbcast.lane.b32.xlu0 %v370, %s423
    %v425 = vpop.permute.xlu0 %424
    %s427 = sor.u32 256, 112
    %428 = vbcast.lane.b32.xlu0 %v370, %s427
    %v429 = vpop.permute.xlu0 %428
    %s431 = sor.u32 256, 120
    %432 = vbcast.lane.b32.xlu0 %v370, %s431
    %v433 = vpop.permute.xlu0 %432
    %v434 = vlaneseq
    %v435 = vshrl.u32 %v434, 7
    %v436 = vsub.s32 6, %v435
    %v437 = vrot.slane %v31, %v436
    %439 = vbcast.lane.b32.xlu0 %v437, 256
    %v440 = vpop.permute.xlu0 %439
    %s442 = sor.u32 256, 8
    %443 = vbcast.lane.b32.xlu0 %v437, %s442
    %v444 = vpop.permute.xlu0 %443
    %s446 = sor.u32 256, 16
    %447 = vbcast.lane.b32.xlu0 %v437, %s446
    %v448 = vpop.permute.xlu0 %447
    %s450 = sor.u32 256, 24
    %451 = vbcast.lane.b32.xlu0 %v437, %s450
    %v452 = vpop.permute.xlu0 %451
    %s454 = sor.u32 256, 32
    %455 = vbcast.lane.b32.xlu0 %v437, %s454
    %v456 = vpop.permute.xlu0 %455
    %s458 = sor.u32 256, 40
    %459 = vbcast.lane.b32.xlu0 %v437, %s458
    %v460 = vpop.permute.xlu0 %459
    %s462 = sor.u32 256, 48
    %463 = vbcast.lane.b32.xlu0 %v437, %s462
    %v464 = vpop.permute.xlu0 %463
    %s466 = sor.u32 256, 56
    %467 = vbcast.lane.b32.xlu0 %v437, %s466
    %v468 = vpop.permute.xlu0 %467
    %s470 = sor.u32 256, 64
    %471 = vbcast.lane.b32.xlu0 %v437, %s470
    %v472 = vpop.permute.xlu0 %471
    %s474 = sor.u32 256, 72
    %475 = vbcast.lane.b32.xlu0 %v437, %s474
    %v476 = vpop.permute.xlu0 %475
    %s478 = sor.u32 256, 80
    %479 = vbcast.lane.b32.xlu0 %v437, %s478
    %v480 = vpop.permute.xlu0 %479
    %s482 = sor.u32 256, 88
    %483 = vbcast.lane.b32.xlu0 %v437, %s482
    %v484 = vpop.permute.xlu0 %483
    %s486 = sor.u32 256, 96
    %487 = vbcast.lane.b32.xlu0 %v437, %s486
    %v488 = vpop.permute.xlu0 %487
    %s490 = sor.u32 256, 104
    %491 = vbcast.lane.b32.xlu0 %v437, %s490
    %v492 = vpop.permute.xlu0 %491
    %s494 = sor.u32 256, 112
    %495 = vbcast.lane.b32.xlu0 %v437, %s494
    %v496 = vpop.permute.xlu0 %495
    %s498 = sor.u32 256, 120
    %499 = vbcast.lane.b32.xlu0 %v437, %s498
    %v500 = vpop.permute.xlu0 %499
    %v501 = vlaneseq
    %v502 = vshrl.u32 %v501, 7
    %v503 = vsub.s32 7, %v502
    %v504 = vrot.slane %v31, %v503
    %506 = vbcast.lane.b32.xlu0 %v504, 256
    %v507 = vpop.permute.xlu0 %506
    %s509 = sor.u32 256, 8
    %510 = vbcast.lane.b32.xlu0 %v504, %s509
    %v511 = vpop.permute.xlu0 %510
    %s513 = sor.u32 256, 16
    %514 = vbcast.lane.b32.xlu0 %v504, %s513
    %v515 = vpop.permute.xlu0 %514
    %s517 = sor.u32 256, 24
    %518 = vbcast.lane.b32.xlu0 %v504, %s517
    %v519 = vpop.permute.xlu0 %518
    %s521 = sor.u32 256, 32
    %522 = vbcast.lane.b32.xlu0 %v504, %s521
    %v523 = vpop.permute.xlu0 %522
    %s525 = sor.u32 256, 40
    %526 = vbcast.lane.b32.xlu0 %v504, %s525
    %v527 = vpop.permute.xlu0 %526
    %s529 = sor.u32 256, 48
    %530 = vbcast.lane.b32.xlu0 %v504, %s529
    %v531 = vpop.permute.xlu0 %530
    %s533 = sor.u32 256, 56
    %534 = vbcast.lane.b32.xlu0 %v504, %s533
    %v535 = vpop.permute.xlu0 %534
    %s537 = sor.u32 256, 64
    %538 = vbcast.lane.b32.xlu0 %v504, %s537
    %v539 = vpop.permute.xlu0 %538
    %s541 = sor.u32 256, 72
    %542 = vbcast.lane.b32.xlu0 %v504, %s541
    %v543 = vpop.permute.xlu0 %542
    %s545 = sor.u32 256, 80
    %546 = vbcast.lane.b32.xlu0 %v504, %s545
    %v547 = vpop.permute.xlu0 %546
    %s549 = sor.u32 256, 88
    %550 = vbcast.lane.b32.xlu0 %v504, %s549
    %v551 = vpop.permute.xlu0 %550
    %s553 = sor.u32 256, 96
    %554 = vbcast.lane.b32.xlu0 %v504, %s553
    %v555 = vpop.permute.xlu0 %554
    %s557 = sor.u32 256, 104
    %558 = vbcast.lane.b32.xlu0 %v504, %s557
    %v559 = vpop.permute.xlu0 %558
    %s561 = sor.u32 256, 112
    %562 = vbcast.lane.b32.xlu0 %v504, %s561
    %v563 = vpop.permute.xlu0 %562
    %s565 = sor.u32 256, 120
    %566 = vbcast.lane.b32.xlu0 %v504, %s565
    %v567 = vpop.permute.xlu0 %566
    %v568 = vld [vmem:[#allocation4] sm:$0xff]
    %v570 = vcombine.high %v568, %v568
    %v572 = vunpack.c.l.s4 1966171168
    %v573 = vunpack.c.0.s8 %v572
    %v574 = vlaneseq
    %v575 = vshrl.u32 %v574, 7
    %v576 = vsub.s32 %v573, %v575
    %v577 = vrot.slane %v568, %v576
    %v579 = vunpack.c.l.s4 1966171168
    %v580 = vunpack.c.0.s8 %v579
    %v581 = vlaneseq
    %v582 = vshrl.u32 %v581, 7
    %v583 = vsub.s32 %v580, %v582
    %v584 = vrot.slane %v570, %v583
    %v585 = vcombine.high %v577, %v577
    %v586 = vcombine.high %v584, %v584
    %v588 = vunpack.c.l.s4 1966171168
    %v589 = vunpack.c.0.s8 %v588
    %v590 = vlaneseq
    %v591 = vshrl.u32 %v590, 7
    %v592 = vsub.s32 %v589, %v591
    %v593 = vrot.slane %v577, %v592
    %v595 = vunpack.c.l.s4 1966171168
    %v596 = vunpack.c.0.s8 %v595
    %v597 = vlaneseq
    %v598 = vshrl.u32 %v597, 7
    %v599 = vsub.s32 %v596, %v598
    %v600 = vrot.slane %v584, %v599
    %v602 = vunpack.c.l.s4 1966171168
    %v603 = vunpack.c.0.s8 %v602
    %v604 = vlaneseq
    %v605 = vshrl.u32 %v604, 7
    %v606 = vsub.s32 %v603, %v605
    %v607 = vrot.slane %v585, %v606
    %v609 = vunpack.c.l.s4 1966171168
    %v610 = vunpack.c.0.s8 %v609
    %v611 = vlaneseq
    %v612 = vshrl.u32 %v611, 7
    %v613 = vsub.s32 %v610, %v612
    %v614 = vrot.slane %v586, %v613
    %v615 = vcombine.high %v593, %v593
    %v616 = vcombine.high %v600, %v600
    %v617 = vcombine.high %v607, %v607
    %v618 = vcombine.high %v614, %v614
    %v619 = vlaneseq
    %v620 = vshrl.u32 %v619, 7
    %v621 = vsub.s32 0, %v620
    %v622 = vrot.slane %v593, %v621
    %v623 = vlaneseq
    %v624 = vshrl.u32 %v623, 7
    %v625 = vsub.s32 0, %v624
    %v626 = vrot.slane %v607, %v625
    %v627 = vlaneseq
    %v628 = vshrl.u32 %v627, 7
    %v629 = vsub.s32 0, %v628
    %v630 = vrot.slane %v615, %v629
    %v631 = vlaneseq
    %v632 = vshrl.u32 %v631, 7
    %v633 = vsub.s32 0, %v632
    %v634 = vrot.slane %v617, %v633
    %v635 = vlaneseq
    %v636 = vshrl.u32 %v635, 7
    %v637 = vsub.s32 0, %v636
    %v638 = vrot.slane %v600, %v637
    %v639 = vlaneseq
    %v640 = vshrl.u32 %v639, 7
    %v641 = vsub.s32 0, %v640
    %v642 = vrot.slane %v614, %v641
    %v643 = vlaneseq
    %v644 = vshrl.u32 %v643, 7
    %v645 = vsub.s32 0, %v644
    %v646 = vrot.slane %v616, %v645
    %v647 = vlaneseq
    %v648 = vshrl.u32 %v647, 7
    %v649 = vsub.s32 0, %v648
    %v650 = vrot.slane %v618, %v649
    %v659 = vsub.f32 %v38, %v622
    %v660 = vsub.f32 %v42, %v622
    %v661 = vsub.f32 %v46, %v622
    %v662 = vsub.f32 %v50, %v622
    %v663 = vsub.f32 %v54, %v622
    %v664 = vsub.f32 %v58, %v622
    %v665 = vsub.f32 %v62, %v622
    %v666 = vsub.f32 %v66, %v622
    %v667 = vsub.f32 %v70, %v622
    %v668 = vsub.f32 %v74, %v622
    %v669 = vsub.f32 %v78, %v622
    %v670 = vsub.f32 %v82, %v622
    %v671 = vsub.f32 %v86, %v622
    %v672 = vsub.f32 %v90, %v622
    %v673 = vsub.f32 %v94, %v622
    %v674 = vsub.f32 %v98, %v622
    %v675 = vsub.f32 %v105, %v626
    %v676 = vsub.f32 %v109, %v626
    %v677 = vsub.f32 %v113, %v626
    %v678 = vsub.f32 %v117, %v626
    %v679 = vsub.f32 %v121, %v626
    %v680 = vsub.f32 %v125, %v626
    %v681 = vsub.f32 %v129, %v626
    %v682 = vsub.f32 %v133, %v626
    %v683 = vsub.f32 %v137, %v626
    %v684 = vsub.f32 %v141, %v626
    %v685 = vsub.f32 %v145, %v626
    %v686 = vsub.f32 %v149, %v626
    %v687 = vsub.f32 %v153, %v626
    %v688 = vsub.f32 %v157, %v626
    %v689 = vsub.f32 %v161, %v626
    %v690 = vsub.f32 %v165, %v626
    %v691 = vsub.f32 %v172, %v630
    %v692 = vsub.f32 %v176, %v630
    %v693 = vsub.f32 %v180, %v630
    %v694 = vsub.f32 %v184, %v630
    %v695 = vsub.f32 %v188, %v630
    %v696 = vsub.f32 %v192, %v630
    %v697 = vsub.f32 %v196, %v630
    %v698 = vsub.f32 %v200, %v630
    %v699 = vsub.f32 %v204, %v630
    %v700 = vsub.f32 %v208, %v630
    %v701 = vsub.f32 %v212, %v630
    %v702 = vsub.f32 %v216, %v630
    %v703 = vsub.f32 %v220, %v630
    %v704 = vsub.f32 %v224, %v630
    %v705 = vsub.f32 %v228, %v630
    %v706 = vsub.f32 %v232, %v630
    %v707 = vsub.f32 %v239, %v634
    %v708 = vsub.f32 %v243, %v634
    %v709 = vsub.f32 %v247, %v634
    %v710 = vsub.f32 %v251, %v634
    %v711 = vsub.f32 %v255, %v634
    %v712 = vsub.f32 %v259, %v634
    %v713 = vsub.f32 %v263, %v634
    %v714 = vsub.f32 %v267, %v634
    %v715 = vsub.f32 %v271, %v634
    %v716 = vsub.f32 %v275, %v634
    %v717 = vsub.f32 %v279, %v634
    %v718 = vsub.f32 %v283, %v634
    %v719 = vsub.f32 %v287, %v634
    %v720 = vsub.f32 %v291, %v634
    %v721 = vsub.f32 %v295, %v634
    %v722 = vsub.f32 %v299, %v634
    %v723 = vsub.f32 %v306, %v638
    %v724 = vsub.f32 %v310, %v638
    %v725 = vsub.f32 %v314, %v638
    %v726 = vsub.f32 %v318, %v638
    %v727 = vsub.f32 %v322, %v638
    %v728 = vsub.f32 %v326, %v638
    %v729 = vsub.f32 %v330, %v638
    %v730 = vsub.f32 %v334, %v638
    %v731 = vsub.f32 %v338, %v638
    %v732 = vsub.f32 %v342, %v638
    %v733 = vsub.f32 %v346, %v638
    %v734 = vsub.f32 %v350, %v638
    %v735 = vsub.f32 %v354, %v638
    %v736 = vsub.f32 %v358, %v638
    %v737 = vsub.f32 %v362, %v638
    %v738 = vsub.f32 %v366, %v638
    %v739 = vsub.f32 %v373, %v642
    %v740 = vsub.f32 %v377, %v642
    %v741 = vsub.f32 %v381, %v642
    %v742 = vsub.f32 %v385, %v642
    %v743 = vsub.f32 %v389, %v642
    %v744 = vsub.f32 %v393, %v642
    %v745 = vsub.f32 %v397, %v642
    %v746 = vsub.f32 %v401, %v642
    %v747 = vsub.f32 %v405, %v642
    %v748 = vsub.f32 %v409, %v642
    %v749 = vsub.f32 %v413, %v642
    %v750 = vsub.f32 %v417, %v642
    %v751 = vsub.f32 %v421, %v642
    %v752 = vsub.f32 %v425, %v642
    %v753 = vsub.f32 %v429, %v642
    %v754 = vsub.f32 %v433, %v642
    %v755 = vsub.f32 %v440, %v646
    %v756 = vsub.f32 %v444, %v646
    %v757 = vsub.f32 %v448, %v646
    %v758 = vsub.f32 %v452, %v646
    %v759 = vsub.f32 %v456, %v646
    %v760 = vsub.f32 %v460, %v646
    %v761 = vsub.f32 %v464, %v646
    %v762 = vsub.f32 %v468, %v646
    %v763 = vsub.f32 %v472, %v646
    %v764 = vsub.f32 %v476, %v646
    %v765 = vsub.f32 %v480, %v646
    %v766 = vsub.f32 %v484, %v646
    %v767 = vsub.f32 %v488, %v646
    %v768 = vsub.f32 %v492, %v646
    %v769 = vsub.f32 %v496, %v646
    %v770 = vsub.f32 %v500, %v646
    %v771 = vsub.f32 %v507, %v650
    %v772 = vsub.f32 %v511, %v650
    %v773 = vsub.f32 %v515, %v650
    %v774 = vsub.f32 %v519, %v650
    %v775 = vsub.f32 %v523, %v650
    %v776 = vsub.f32 %v527, %v650
    %v777 = vsub.f32 %v531, %v650
    %v778 = vsub.f32 %v535, %v650
    %v779 = vsub.f32 %v539, %v650
    %v780 = vsub.f32 %v543, %v650
    %v781 = vsub.f32 %v547, %v650
    %v782 = vsub.f32 %v551, %v650
    %v783 = vsub.f32 %v555, %v650
    %v784 = vsub.f32 %v559, %v650
    %v785 = vsub.f32 %v563, %v650
    %v786 = vsub.f32 %v567, %v650
    %v787 = vand.u32 2147483647, %v659
    %v788 = vand.u32 2147483647, %v660
    %v789 = vand.u32 2147483647, %v661
    %v790 = vand.u32 2147483647, %v662
    %v791 = vand.u32 2147483647, %v663
    %v792 = vand.u32 2147483647, %v664
    %v793 = vand.u32 2147483647, %v665
    %v794 = vand.u32 2147483647, %v666
    %v795 = vand.u32 2147483647, %v667
    %v796 = vand.u32 2147483647, %v668
    %v797 = vand.u32 2147483647, %v669
    %v798 = vand.u32 2147483647, %v670
    %v799 = vand.u32 2147483647, %v671
    %v800 = vand.u32 2147483647, %v672
    %v801 = vand.u32 2147483647, %v673
    %v802 = vand.u32 2147483647, %v674
    %v803 = vand.u32 2147483647, %v675
    %v804 = vand.u32 2147483647, %v676
    %v805 = vand.u32 2147483647, %v677
    %v806 = vand.u32 2147483647, %v678
    %v807 = vand.u32 2147483647, %v679
    %v808 = vand.u32 2147483647, %v680
    %v809 = vand.u32 2147483647, %v681
    %v810 = vand.u32 2147483647, %v682
    %v811 = vand.u32 2147483647, %v683
    %v812 = vand.u32 2147483647, %v684
    %v813 = vand.u32 2147483647, %v685
    %v814 = vand.u32 2147483647, %v686
    %v815 = vand.u32 2147483647, %v687
    %v816 = vand.u32 2147483647, %v688
    %v817 = vand.u32 2147483647, %v689
    %v818 = vand.u32 2147483647, %v690
    %v819 = vand.u32 2147483647, %v691
    %v820 = vand.u32 2147483647, %v692
    %v821 = vand.u32 2147483647, %v693
    %v822 = vand.u32 2147483647, %v694
    %v823 = vand.u32 2147483647, %v695
    %v824 = vand.u32 2147483647, %v696
    %v825 = vand.u32 2147483647, %v697
    %v826 = vand.u32 2147483647, %v698
    %v827 = vand.u32 2147483647, %v699
    %v828 = vand.u32 2147483647, %v700
    %v829 = vand.u32 2147483647, %v701
    %v830 = vand.u32 2147483647, %v702
    %v831 = vand.u32 2147483647, %v703
    %v832 = vand.u32 2147483647, %v704
    %v833 = vand.u32 2147483647, %v705
    %v834 = vand.u32 2147483647, %v706
    %v835 = vand.u32 2147483647, %v707
    %v836 = vand.u32 2147483647, %v708
    %v837 = vand.u32 2147483647, %v709
    %v838 = vand.u32 2147483647, %v710
    %v839 = vand.u32 2147483647, %v711
    %v840 = vand.u32 2147483647, %v712
    %v841 = vand.u32 2147483647, %v713
    %v842 = vand.u32 2147483647, %v714
    %v843 = vand.u32 2147483647, %v715
    %v844 = vand.u32 2147483647, %v716
    %v845 = vand.u32 2147483647, %v717
    %v846 = vand.u32 2147483647, %v718
    %v847 = vand.u32 2147483647, %v719
    %v848 = vand.u32 2147483647, %v720
    %v849 = vand.u32 2147483647, %v721
    %v850 = vand.u32 2147483647, %v722
    %v851 = vand.u32 2147483647, %v723
    %v852 = vand.u32 2147483647, %v724
    %v853 = vand.u32 2147483647, %v725
    %v854 = vand.u32 2147483647, %v726
    %v855 = vand.u32 2147483647, %v727
    %v856 = vand.u32 2147483647, %v728
    %v857 = vand.u32 2147483647, %v729
    %v858 = vand.u32 2147483647, %v730
    %v859 = vand.u32 2147483647, %v731
    %v860 = vand.u32 2147483647, %v732
    %v861 = vand.u32 2147483647, %v733
    %v862 = vand.u32 2147483647, %v734
    %v863 = vand.u32 2147483647, %v735
    %v864 = vand.u32 2147483647, %v736
    %v865 = vand.u32 2147483647, %v737
    %v866 = vand.u32 2147483647, %v738
    %v867 = vand.u32 2147483647, %v739
    %v868 = vand.u32 2147483647, %v740
    %v869 = vand.u32 2147483647, %v741
    %v870 = vand.u32 2147483647, %v742
    %v871 = vand.u32 2147483647, %v743
    %v872 = vand.u32 2147483647, %v744
    %v873 = vand.u32 2147483647, %v745
    %v874 = vand.u32 2147483647, %v746
    %v875 = vand.u32 2147483647, %v747
    %v876 = vand.u32 2147483647, %v748
    %v877 = vand.u32 2147483647, %v749
    %v878 = vand.u32 2147483647, %v750
    %v879 = vand.u32 2147483647, %v751
    %v880 = vand.u32 2147483647, %v752
    %v881 = vand.u32 2147483647, %v753
    %v882 = vand.u32 2147483647, %v754
    %v883 = vand.u32 2147483647, %v755
    %v884 = vand.u32 2147483647, %v756
    %v885 = vand.u32 2147483647, %v757
    %v886 = vand.u32 2147483647, %v758
    %v887 = vand.u32 2147483647, %v759
    %v888 = vand.u32 2147483647, %v760
    %v889 = vand.u32 2147483647, %v761
    %v890 = vand.u32 2147483647, %v762
    %v891 = vand.u32 2147483647, %v763
    %v892 = vand.u32 2147483647, %v764
    %v893 = vand.u32 2147483647, %v765
    %v894 = vand.u32 2147483647, %v766
    %v895 = vand.u32 2147483647, %v767
    %v896 = vand.u32 2147483647, %v768
    %v897 = vand.u32 2147483647, %v769
    %v898 = vand.u32 2147483647, %v770
    %v899 = vand.u32 2147483647, %v771
    %v900 = vand.u32 2147483647, %v772
    %v901 = vand.u32 2147483647, %v773
    %v902 = vand.u32 2147483647, %v774
    %v903 = vand.u32 2147483647, %v775
    %v904 = vand.u32 2147483647, %v776
    %v905 = vand.u32 2147483647, %v777
    %v906 = vand.u32 2147483647, %v778
    %v907 = vand.u32 2147483647, %v779
    %v908 = vand.u32 2147483647, %v780
    %v909 = vand.u32 2147483647, %v781
    %v910 = vand.u32 2147483647, %v782
    %v911 = vand.u32 2147483647, %v783
    %v912 = vand.u32 2147483647, %v784
    %v913 = vand.u32 2147483647, %v785
    %v914 = vand.u32 2147483647, %v786
    %915 = vadd.xlane.f32.xlu0 %v787
    %v916 = vpop.xlane.xlu0 %915
    %917 = vadd.xlane.f32.xlu0 %v788
    %v918 = vpop.xlane.xlu0 %917
    %919 = vadd.xlane.f32.xlu0 %v789
    %v920 = vpop.xlane.xlu0 %919
    %921 = vadd.xlane.f32.xlu0 %v790
    %v922 = vpop.xlane.xlu0 %921
    %923 = vadd.xlane.f32.xlu0 %v791
    %v924 = vpop.xlane.xlu0 %923
    %925 = vadd.xlane.f32.xlu0 %v792
    %v926 = vpop.xlane.xlu0 %925
    %927 = vadd.xlane.f32.xlu0 %v793
    %v928 = vpop.xlane.xlu0 %927
    %929 = vadd.xlane.f32.xlu0 %v794
    %v930 = vpop.xlane.xlu0 %929
    %931 = vadd.xlane.f32.xlu0 %v795
    %v932 = vpop.xlane.xlu0 %931
    %933 = vadd.xlane.f32.xlu0 %v796
    %v934 = vpop.xlane.xlu0 %933
    %935 = vadd.xlane.f32.xlu0 %v797
    %v936 = vpop.xlane.xlu0 %935
    %937 = vadd.xlane.f32.xlu0 %v798
    %v938 = vpop.xlane.xlu0 %937
    %939 = vadd.xlane.f32.xlu0 %v799
    %v940 = vpop.xlane.xlu0 %939
    %941 = vadd.xlane.f32.xlu0 %v800
    %v942 = vpop.xlane.xlu0 %941
    %943 = vadd.xlane.f32.xlu0 %v801
    %v944 = vpop.xlane.xlu0 %943
    %945 = vadd.xlane.f32.xlu0 %v802
    %v946 = vpop.xlane.xlu0 %945
    %947 = vadd.xlane.f32.xlu0 %v803
    %v948 = vpop.xlane.xlu0 %947
    %949 = vadd.xlane.f32.xlu0 %v804
    %v950 = vpop.xlane.xlu0 %949
    %951 = vadd.xlane.f32.xlu0 %v805
    %v952 = vpop.xlane.xlu0 %951
    %953 = vadd.xlane.f32.xlu0 %v806
    %v954 = vpop.xlane.xlu0 %953
    %955 = vadd.xlane.f32.xlu0 %v807
    %v956 = vpop.xlane.xlu0 %955
    %957 = vadd.xlane.f32.xlu0 %v808
    %v958 = vpop.xlane.xlu0 %957
    %959 = vadd.xlane.f32.xlu0 %v809
    %v960 = vpop.xlane.xlu0 %959
    %961 = vadd.xlane.f32.xlu0 %v810
    %v962 = vpop.xlane.xlu0 %961
    %963 = vadd.xlane.f32.xlu0 %v811
    %v964 = vpop.xlane.xlu0 %963
    %965 = vadd.xlane.f32.xlu0 %v812
    %v966 = vpop.xlane.xlu0 %965
    %967 = vadd.xlane.f32.xlu0 %v813
    %v968 = vpop.xlane.xlu0 %967
    %969 = vadd.xlane.f32.xlu0 %v814
    %v970 = vpop.xlane.xlu0 %969
    %971 = vadd.xlane.f32.xlu0 %v815
    %v972 = vpop.xlane.xlu0 %971
    %973 = vadd.xlane.f32.xlu0 %v816
    %v974 = vpop.xlane.xlu0 %973
    %975 = vadd.xlane.f32.xlu0 %v817
    %v976 = vpop.xlane.xlu0 %975
    %977 = vadd.xlane.f32.xlu0 %v818
    %v978 = vpop.xlane.xlu0 %977
    %979 = vadd.xlane.f32.xlu0 %v819
    %v980 = vpop.xlane.xlu0 %979
    %981 = vadd.xlane.f32.xlu0 %v820
    %v982 = vpop.xlane.xlu0 %981
    %983 = vadd.xlane.f32.xlu0 %v821
    %v984 = vpop.xlane.xlu0 %983
    %985 = vadd.xlane.f32.xlu0 %v822
    %v986 = vpop.xlane.xlu0 %985
    %987 = vadd.xlane.f32.xlu0 %v823
    %v988 = vpop.xlane.xlu0 %987
    %989 = vadd.xlane.f32.xlu0 %v824
    %v990 = vpop.xlane.xlu0 %989
    %991 = vadd.xlane.f32.xlu0 %v825
    %v992 = vpop.xlane.xlu0 %991
    %993 = vadd.xlane.f32.xlu0 %v826
    %v994 = vpop.xlane.xlu0 %993
    %995 = vadd.xlane.f32.xlu0 %v827
    %v996 = vpop.xlane.xlu0 %995
    %997 = vadd.xlane.f32.xlu0 %v828
    %v998 = vpop.xlane.xlu0 %997
    %999 = vadd.xlane.f32.xlu0 %v829
    %v1000 = vpop.xlane.xlu0 %999
    %1001 = vadd.xlane.f32.xlu0 %v830
    %v1002 = vpop.xlane.xlu0 %1001
    %1003 = vadd.xlane.f32.xlu0 %v831
    %v1004 = vpop.xlane.xlu0 %1003
    %1005 = vadd.xlane.f32.xlu0 %v832
    %v1006 = vpop.xlane.xlu0 %1005
    %1007 = vadd.xlane.f32.xlu0 %v833
    %v1008 = vpop.xlane.xlu0 %1007
    %1009 = vadd.xlane.f32.xlu0 %v834
    %v1010 = vpop.xlane.xlu0 %1009
    %1011 = vadd.xlane.f32.xlu0 %v835
    %v1012 = vpop.xlane.xlu0 %1011
    %1013 = vadd.xlane.f32.xlu0 %v836
    %v1014 = vpop.xlane.xlu0 %1013
    %1015 = vadd.xlane.f32.xlu0 %v837
    %v1016 = vpop.xlane.xlu0 %1015
    %1017 = vadd.xlane.f32.xlu0 %v838
    %v1018 = vpop.xlane.xlu0 %1017
    %1019 = vadd.xlane.f32.xlu0 %v839
    %v1020 = vpop.xlane.xlu0 %1019
    %1021 = vadd.xlane.f32.xlu0 %v840
    %v1022 = vpop.xlane.xlu0 %1021
    %1023 = vadd.xlane.f32.xlu0 %v841
    %v1024 = vpop.xlane.xlu0 %1023
    %1025 = vadd.xlane.f32.xlu0 %v842
    %v1026 = vpop.xlane.xlu0 %1025
    %1027 = vadd.xlane.f32.xlu0 %v843
    %v1028 = vpop.xlane.xlu0 %1027
    %1029 = vadd.xlane.f32.xlu0 %v844
    %v1030 = vpop.xlane.xlu0 %1029
    %1031 = vadd.xlane.f32.xlu0 %v845
    %v1032 = vpop.xlane.xlu0 %1031
    %1033 = vadd.xlane.f32.xlu0 %v846
    %v1034 = vpop.xlane.xlu0 %1033
    %1035 = vadd.xlane.f32.xlu0 %v847
    %v1036 = vpop.xlane.xlu0 %1035
    %1037 = vadd.xlane.f32.xlu0 %v848
    %v1038 = vpop.xlane.xlu0 %1037
    %1039 = vadd.xlane.f32.xlu0 %v849
    %v1040 = vpop.xlane.xlu0 %1039
    %1041 = vadd.xlane.f32.xlu0 %v850
    %v1042 = vpop.xlane.xlu0 %1041
    %1043 = vadd.xlane.f32.xlu0 %v851
    %v1044 = vpop.xlane.xlu0 %1043
    %1045 = vadd.xlane.f32.xlu0 %v852
    %v1046 = vpop.xlane.xlu0 %1045
    %1047 = vadd.xlane.f32.xlu0 %v853
    %v1048 = vpop.xlane.xlu0 %1047
    %1049 = vadd.xlane.f32.xlu0 %v854
    %v1050 = vpop.xlane.xlu0 %1049
    %1051 = vadd.xlane.f32.xlu0 %v855
    %v1052 = vpop.xlane.xlu0 %1051
    %1053 = vadd.xlane.f32.xlu0 %v856
    %v1054 = vpop.xlane.xlu0 %1053
    %1055 = vadd.xlane.f32.xlu0 %v857
    %v1056 = vpop.xlane.xlu0 %1055
    %1057 = vadd.xlane.f32.xlu0 %v858
    %v1058 = vpop.xlane.xlu0 %1057
    %1059 = vadd.xlane.f32.xlu0 %v859
    %v1060 = vpop.xlane.xlu0 %1059
    %1061 = vadd.xlane.f32.xlu0 %v860
    %v1062 = vpop.xlane.xlu0 %1061
    %1063 = vadd.xlane.f32.xlu0 %v861
    %v1064 = vpop.xlane.xlu0 %1063
    %1065 = vadd.xlane.f32.xlu0 %v862
    %v1066 = vpop.xlane.xlu0 %1065
    %1067 = vadd.xlane.f32.xlu0 %v863
    %v1068 = vpop.xlane.xlu0 %1067
    %1069 = vadd.xlane.f32.xlu0 %v864
    %v1070 = vpop.xlane.xlu0 %1069
    %1071 = vadd.xlane.f32.xlu0 %v865
    %v1072 = vpop.xlane.xlu0 %1071
    %1073 = vadd.xlane.f32.xlu0 %v866
    %v1074 = vpop.xlane.xlu0 %1073
    %1075 = vadd.xlane.f32.xlu0 %v867
    %v1076 = vpop.xlane.xlu0 %1075
    %1077 = vadd.xlane.f32.xlu0 %v868
    %v1078 = vpop.xlane.xlu0 %1077
    %1079 = vadd.xlane.f32.xlu0 %v869
    %v1080 = vpop.xlane.xlu0 %1079
    %1081 = vadd.xlane.f32.xlu0 %v870
    %v1082 = vpop.xlane.xlu0 %1081
    %1083 = vadd.xlane.f32.xlu0 %v871
    %v1084 = vpop.xlane.xlu0 %1083
    %1085 = vadd.xlane.f32.xlu0 %v872
    %v1086 = vpop.xlane.xlu0 %1085
    %1087 = vadd.xlane.f32.xlu0 %v873
    %v1088 = vpop.xlane.xlu0 %1087
    %1089 = vadd.xlane.f32.xlu0 %v874
    %v1090 = vpop.xlane.xlu0 %1089
    %1091 = vadd.xlane.f32.xlu0 %v875
    %v1092 = vpop.xlane.xlu0 %1091
    %1093 = vadd.xlane.f32.xlu0 %v876
    %v1094 = vpop.xlane.xlu0 %1093
    %1095 = vadd.xlane.f32.xlu0 %v877
    %v1096 = vpop.xlane.xlu0 %1095
    %1097 = vadd.xlane.f32.xlu0 %v878
    %v1098 = vpop.xlane.xlu0 %1097
    %1099 = vadd.xlane.f32.xlu0 %v879
    %v1100 = vpop.xlane.xlu0 %1099
    %1101 = vadd.xlane.f32.xlu0 %v880
    %v1102 = vpop.xlane.xlu0 %1101
    %1103 = vadd.xlane.f32.xlu0 %v881
    %v1104 = vpop.xlane.xlu0 %1103
    %1105 = vadd.xlane.f32.xlu0 %v882
    %v1106 = vpop.xlane.xlu0 %1105
    %1107 = vadd.xlane.f32.xlu0 %v883
    %v1108 = vpop.xlane.xlu0 %1107
    %1109 = vadd.xlane.f32.xlu0 %v884
    %v1110 = vpop.xlane.xlu0 %1109
    %1111 = vadd.xlane.f32.xlu0 %v885
    %v1112 = vpop.xlane.xlu0 %1111
    %1113 = vadd.xlane.f32.xlu0 %v886
    %v1114 = vpop.xlane.xlu0 %1113
    %1115 = vadd.xlane.f32.xlu0 %v887
    %v1116 = vpop.xlane.xlu0 %1115
    %1117 = vadd.xlane.f32.xlu0 %v888
    %v1118 = vpop.xlane.xlu0 %1117
    %1119 = vadd.xlane.f32.xlu0 %v889
    %v1120 = vpop.xlane.xlu0 %1119
    %1121 = vadd.xlane.f32.xlu0 %v890
    %v1122 = vpop.xlane.xlu0 %1121
    %1123 = vadd.xlane.f32.xlu0 %v891
    %v1124 = vpop.xlane.xlu0 %1123
    %1125 = vadd.xlane.f32.xlu0 %v892
    %v1126 = vpop.xlane.xlu0 %1125
    %1127 = vadd.xlane.f32.xlu0 %v893
    %v1128 = vpop.xlane.xlu0 %1127
    %1129 = vadd.xlane.f32.xlu0 %v894
    %v1130 = vpop.xlane.xlu0 %1129
    %1131 = vadd.xlane.f32.xlu0 %v895
    %v1132 = vpop.xlane.xlu0 %1131
    %1133 = vadd.xlane.f32.xlu0 %v896
    %v1134 = vpop.xlane.xlu0 %1133
    %1135 = vadd.xlane.f32.xlu0 %v897
    %v1136 = vpop.xlane.xlu0 %1135
    %1137 = vadd.xlane.f32.xlu0 %v898
    %v1138 = vpop.xlane.xlu0 %1137
    %1139 = vadd.xlane.f32.xlu0 %v899
    %v1140 = vpop.xlane.xlu0 %1139
    %1141 = vadd.xlane.f32.xlu0 %v900
    %v1142 = vpop.xlane.xlu0 %1141
    %1143 = vadd.xlane.f32.xlu0 %v901
    %v1144 = vpop.xlane.xlu0 %1143
    %1145 = vadd.xlane.f32.xlu0 %v902
    %v1146 = vpop.xlane.xlu0 %1145
    %1147 = vadd.xlane.f32.xlu0 %v903
    %v1148 = vpop.xlane.xlu0 %1147
    %1149 = vadd.xlane.f32.xlu0 %v904
    %v1150 = vpop.xlane.xlu0 %1149
    %1151 = vadd.xlane.f32.xlu0 %v905
    %v1152 = vpop.xlane.xlu0 %1151
    %1153 = vadd.xlane.f32.xlu0 %v906
    %v1154 = vpop.xlane.xlu0 %1153
    %1155 = vadd.xlane.f32.xlu0 %v907
    %v1156 = vpop.xlane.xlu0 %1155
    %1157 = vadd.xlane.f32.xlu0 %v908
    %v1158 = vpop.xlane.xlu0 %1157
    %1159 = vadd.xlane.f32.xlu0 %v909
    %v1160 = vpop.xlane.xlu0 %1159
    %1161 = vadd.xlane.f32.xlu0 %v910
    %v1162 = vpop.xlane.xlu0 %1161
    %1163 = vadd.xlane.f32.xlu0 %v911
    %v1164 = vpop.xlane.xlu0 %1163
    %1165 = vadd.xlane.f32.xlu0 %v912
    %v1166 = vpop.xlane.xlu0 %1165
    %1167 = vadd.xlane.f32.xlu0 %v913
    %v1168 = vpop.xlane.xlu0 %1167
    %1169 = vadd.xlane.f32.xlu0 %v914
    %v1170 = vpop.xlane.xlu0 %1169
    %v1171 = vand.u32 2147483647, %v31
    %v1172 = vmul.f32 %v1171, 112.0
    %v1174 = vlaneseq
    %v1175 = vshrl.u32 %v1174, 7
    %v1176 = vsub.s32 0, %v1175
    %v1177 = vrot.slane %v1172, %v1176
    %1179 = vbcast.lane.b32.xlu0 %v1177, 256
    %v1180 = vpop.permute.xlu0 %1179
    %s1182 = sor.u32 256, 8
    %1183 = vbcast.lane.b32.xlu0 %v1177, %s1182
    %v1184 = vpop.permute.xlu0 %1183
    %s1186 = sor.u32 256, 16
    %1187 = vbcast.lane.b32.xlu0 %v1177, %s1186
    %v1188 = vpop.permute.xlu0 %1187
    %s1190 = sor.u32 256, 24
    %1191 = vbcast.lane.b32.xlu0 %v1177, %s1190
    %v1192 = vpop.permute.xlu0 %1191
    %s1194 = sor.u32 256, 32
    %1195 = vbcast.lane.b32.xlu0 %v1177, %s1194
    %v1196 = vpop.permute.xlu0 %1195
    %s1198 = sor.u32 256, 40
    %1199 = vbcast.lane.b32.xlu0 %v1177, %s1198
    %v1200 = vpop.permute.xlu0 %1199
    %s1202 = sor.u32 256, 48
    %1203 = vbcast.lane.b32.xlu0 %v1177, %s1202
    %v1204 = vpop.permute.xlu0 %1203
    %s1206 = sor.u32 256, 56
    %1207 = vbcast.lane.b32.xlu0 %v1177, %s1206
    %v1208 = vpop.permute.xlu0 %1207
    %s1210 = sor.u32 256, 64
    %1211 = vbcast.lane.b32.xlu0 %v1177, %s1210
    %v1212 = vpop.permute.xlu0 %1211
    %s1214 = sor.u32 256, 72
    %1215 = vbcast.lane.b32.xlu0 %v1177, %s1214
    %v1216 = vpop.permute.xlu0 %1215
    %s1218 = sor.u32 256, 80
    %1219 = vbcast.lane.b32.xlu0 %v1177, %s1218
    %v1220 = vpop.permute.xlu0 %1219
    %s1222 = sor.u32 256, 88
    %1223 = vbcast.lane.b32.xlu0 %v1177, %s1222
    %v1224 = vpop.permute.xlu0 %1223
    %s1226 = sor.u32 256, 96
    %1227 = vbcast.lane.b32.xlu0 %v1177, %s1226
    %v1228 = vpop.permute.xlu0 %1227
    %s1230 = sor.u32 256, 104
    %1231 = vbcast.lane.b32.xlu0 %v1177, %s1230
    %v1232 = vpop.permute.xlu0 %1231
    %s1234 = sor.u32 256, 112
    %1235 = vbcast.lane.b32.xlu0 %v1177, %s1234
    %v1236 = vpop.permute.xlu0 %1235
    %s1238 = sor.u32 256, 120
    %1239 = vbcast.lane.b32.xlu0 %v1177, %s1238
    %v1240 = vpop.permute.xlu0 %1239
    %v1241 = vlaneseq
    %v1242 = vshrl.u32 %v1241, 7
    %v1243 = vsub.s32 1, %v1242
    %v1244 = vrot.slane %v1172, %v1243
    %1246 = vbcast.lane.b32.xlu0 %v1244, 256
    %v1247 = vpop.permute.xlu0 %1246
    %s1249 = sor.u32 256, 8
    %1250 = vbcast.lane.b32.xlu0 %v1244, %s1249
    %v1251 = vpop.permute.xlu0 %1250
    %s1253 = sor.u32 256, 16
    %1254 = vbcast.lane.b32.xlu0 %v1244, %s1253
    %v1255 = vpop.permute.xlu0 %1254
    %s1257 = sor.u32 256, 24
    %1258 = vbcast.lane.b32.xlu0 %v1244, %s1257
    %v1259 = vpop.permute.xlu0 %1258
    %s1261 = sor.u32 256, 32
    %1262 = vbcast.lane.b32.xlu0 %v1244, %s1261
    %v1263 = vpop.permute.xlu0 %1262
    %s1265 = sor.u32 256, 40
    %1266 = vbcast.lane.b32.xlu0 %v1244, %s1265
    %v1267 = vpop.permute.xlu0 %1266
    %s1269 = sor.u32 256, 48
    %1270 = vbcast.lane.b32.xlu0 %v1244, %s1269
    %v1271 = vpop.permute.xlu0 %1270
    %s1273 = sor.u32 256, 56
    %1274 = vbcast.lane.b32.xlu0 %v1244, %s1273
    %v1275 = vpop.permute.xlu0 %1274
    %s1277 = sor.u32 256, 64
    %1278 = vbcast.lane.b32.xlu0 %v1244, %s1277
    %v1279 = vpop.permute.xlu0 %1278
    %s1281 = sor.u32 256, 72
    %1282 = vbcast.lane.b32.xlu0 %v1244, %s1281
    %v1283 = vpop.permute.xlu0 %1282
    %s1285 = sor.u32 256, 80
    %1286 = vbcast.lane.b32.xlu0 %v1244, %s1285
    %v1287 = vpop.permute.xlu0 %1286
    %s1289 = sor.u32 256, 88
    %1290 = vbcast.lane.b32.xlu0 %v1244, %s1289
    %v1291 = vpop.permute.xlu0 %1290
    %s1293 = sor.u32 256, 96
    %1294 = vbcast.lane.b32.xlu0 %v1244, %s1293
    %v1295 = vpop.permute.xlu0 %1294
    %s1297 = sor.u32 256, 104
    %1298 = vbcast.lane.b32.xlu0 %v1244, %s1297
    %v1299 = vpop.permute.xlu0 %1298
    %s1301 = sor.u32 256, 112
    %1302 = vbcast.lane.b32.xlu0 %v1244, %s1301
    %v1303 = vpop.permute.xlu0 %1302
    %s1305 = sor.u32 256, 120
    %1306 = vbcast.lane.b32.xlu0 %v1244, %s1305
    %v1307 = vpop.permute.xlu0 %1306
    %v1308 = vlaneseq
    %v1309 = vshrl.u32 %v1308, 7
    %v1310 = vsub.s32 2, %v1309
    %v1311 = vrot.slane %v1172, %v1310
    %1313 = vbcast.lane.b32.xlu0 %v1311, 256
    %v1314 = vpop.permute.xlu0 %1313
    %s1316 = sor.u32 256, 8
    %1317 = vbcast.lane.b32.xlu0 %v1311, %s1316
    %v1318 = vpop.permute.xlu0 %1317
    %s1320 = sor.u32 256, 16
    %1321 = vbcast.lane.b32.xlu0 %v1311, %s1320
    %v1322 = vpop.permute.xlu0 %1321
    %s1324 = sor.u32 256, 24
    %1325 = vbcast.lane.b32.xlu0 %v1311, %s1324
    %v1326 = vpop.permute.xlu0 %1325
    %s1328 = sor.u32 256, 32
    %1329 = vbcast.lane.b32.xlu0 %v1311, %s1328
    %v1330 = vpop.permute.xlu0 %1329
    %s1332 = sor.u32 256, 40
    %1333 = vbcast.lane.b32.xlu0 %v1311, %s1332
    %v1334 = vpop.permute.xlu0 %1333
    %s1336 = sor.u32 256, 48
    %1337 = vbcast.lane.b32.xlu0 %v1311, %s1336
    %v1338 = vpop.permute.xlu0 %1337
    %s1340 = sor.u32 256, 56
    %1341 = vbcast.lane.b32.xlu0 %v1311, %s1340
    %v1342 = vpop.permute.xlu0 %1341
    %s1344 = sor.u32 256, 64
    %1345 = vbcast.lane.b32.xlu0 %v1311, %s1344
    %v1346 = vpop.permute.xlu0 %1345
    %s1348 = sor.u32 256, 72
    %1349 = vbcast.lane.b32.xlu0 %v1311, %s1348
    %v1350 = vpop.permute.xlu0 %1349
    %s1352 = sor.u32 256, 80
    %1353 = vbcast.lane.b32.xlu0 %v1311, %s1352
    %v1354 = vpop.permute.xlu0 %1353
    %s1356 = sor.u32 256, 88
    %1357 = vbcast.lane.b32.xlu0 %v1311, %s1356
    %v1358 = vpop.permute.xlu0 %1357
    %s1360 = sor.u32 256, 96
    %1361 = vbcast.lane.b32.xlu0 %v1311, %s1360
    %v1362 = vpop.permute.xlu0 %1361
    %s1364 = sor.u32 256, 104
    %1365 = vbcast.lane.b32.xlu0 %v1311, %s1364
    %v1366 = vpop.permute.xlu0 %1365
    %s1368 = sor.u32 256, 112
    %1369 = vbcast.lane.b32.xlu0 %v1311, %s1368
    %v1370 = vpop.permute.xlu0 %1369
    %s1372 = sor.u32 256, 120
    %1373 = vbcast.lane.b32.xlu0 %v1311, %s1372
    %v1374 = vpop.permute.xlu0 %1373
    %v1375 = vlaneseq
    %v1376 = vshrl.u32 %v1375, 7
    %v1377 = vsub.s32 3, %v1376
    %v1378 = vrot.slane %v1172, %v1377
    %1380 = vbcast.lane.b32.xlu0 %v1378, 256
    %v1381 = vpop.permute.xlu0 %1380
    %s1383 = sor.u32 256, 8
    %1384 = vbcast.lane.b32.xlu0 %v1378, %s1383
    %v1385 = vpop.permute.xlu0 %1384
    %s1387 = sor.u32 256, 16
    %1388 = vbcast.lane.b32.xlu0 %v1378, %s1387
    %v1389 = vpop.permute.xlu0 %1388
    %s1391 = sor.u32 256, 24
    %1392 = vbcast.lane.b32.xlu0 %v1378, %s1391
    %v1393 = vpop.permute.xlu0 %1392
    %s1395 = sor.u32 256, 32
    %1396 = vbcast.lane.b32.xlu0 %v1378, %s1395
    %v1397 = vpop.permute.xlu0 %1396
    %s1399 = sor.u32 256, 40
    %1400 = vbcast.lane.b32.xlu0 %v1378, %s1399
    %v1401 = vpop.permute.xlu0 %1400
    %s1403 = sor.u32 256, 48
    %1404 = vbcast.lane.b32.xlu0 %v1378, %s1403
    %v1405 = vpop.permute.xlu0 %1404
    %s1407 = sor.u32 256, 56
    %1408 = vbcast.lane.b32.xlu0 %v1378, %s1407
    %v1409 = vpop.permute.xlu0 %1408
    %s1411 = sor.u32 256, 64
    %1412 = vbcast.lane.b32.xlu0 %v1378, %s1411
    %v1413 = vpop.permute.xlu0 %1412
    %s1415 = sor.u32 256, 72
    %1416 = vbcast.lane.b32.xlu0 %v1378, %s1415
    %v1417 = vpop.permute.xlu0 %1416
    %s1419 = sor.u32 256, 80
    %1420 = vbcast.lane.b32.xlu0 %v1378, %s1419
    %v1421 = vpop.permute.xlu0 %1420
    %s1423 = sor.u32 256, 88
    %1424 = vbcast.lane.b32.xlu0 %v1378, %s1423
    %v1425 = vpop.permute.xlu0 %1424
    %s1427 = sor.u32 256, 96
    %1428 = vbcast.lane.b32.xlu0 %v1378, %s1427
    %v1429 = vpop.permute.xlu0 %1428
    %s1431 = sor.u32 256, 104
    %1432 = vbcast.lane.b32.xlu0 %v1378, %s1431
    %v1433 = vpop.permute.xlu0 %1432
    %s1435 = sor.u32 256, 112
    %1436 = vbcast.lane.b32.xlu0 %v1378, %s1435
    %v1437 = vpop.permute.xlu0 %1436
    %s1439 = sor.u32 256, 120
    %1440 = vbcast.lane.b32.xlu0 %v1378, %s1439
    %v1441 = vpop.permute.xlu0 %1440
    %v1442 = vlaneseq
    %v1443 = vshrl.u32 %v1442, 7
    %v1444 = vsub.s32 4, %v1443
    %v1445 = vrot.slane %v1172, %v1444
    %1447 = vbcast.lane.b32.xlu0 %v1445, 256
    %v1448 = vpop.permute.xlu0 %1447
    %s1450 = sor.u32 256, 8
    %1451 = vbcast.lane.b32.xlu0 %v1445, %s1450
    %v1452 = vpop.permute.xlu0 %1451
    %s1454 = sor.u32 256, 16
    %1455 = vbcast.lane.b32.xlu0 %v1445, %s1454
    %v1456 = vpop.permute.xlu0 %1455
    %s1458 = sor.u32 256, 24
    %1459 = vbcast.lane.b32.xlu0 %v1445, %s1458
    %v1460 = vpop.permute.xlu0 %1459
    %s1462 = sor.u32 256, 32
    %1463 = vbcast.lane.b32.xlu0 %v1445, %s1462
    %v1464 = vpop.permute.xlu0 %1463
    %s1466 = sor.u32 256, 40
    %1467 = vbcast.lane.b32.xlu0 %v1445, %s1466
    %v1468 = vpop.permute.xlu0 %1467
    %s1470 = sor.u32 256, 48
    %1471 = vbcast.lane.b32.xlu0 %v1445, %s1470
    %v1472 = vpop.permute.xlu0 %1471
    %s1474 = sor.u32 256, 56
    %1475 = vbcast.lane.b32.xlu0 %v1445, %s1474
    %v1476 = vpop.permute.xlu0 %1475
    %s1478 = sor.u32 256, 64
    %1479 = vbcast.lane.b32.xlu0 %v1445, %s1478
    %v1480 = vpop.permute.xlu0 %1479
    %s1482 = sor.u32 256, 72
    %1483 = vbcast.lane.b32.xlu0 %v1445, %s1482
    %v1484 = vpop.permute.xlu0 %1483
    %s1486 = sor.u32 256, 80
    %1487 = vbcast.lane.b32.xlu0 %v1445, %s1486
    %v1488 = vpop.permute.xlu0 %1487
    %s1490 = sor.u32 256, 88
    %1491 = vbcast.lane.b32.xlu0 %v1445, %s1490
    %v1492 = vpop.permute.xlu0 %1491
    %s1494 = sor.u32 256, 96
    %1495 = vbcast.lane.b32.xlu0 %v1445, %s1494
    %v1496 = vpop.permute.xlu0 %1495
    %s1498 = sor.u32 256, 104
    %1499 = vbcast.lane.b32.xlu0 %v1445, %s1498
    %v1500 = vpop.permute.xlu0 %1499
    %s1502 = sor.u32 256, 112
    %1503 = vbcast.lane.b32.xlu0 %v1445, %s1502
    %v1504 = vpop.permute.xlu0 %1503
    %s1506 = sor.u32 256, 120
    %1507 = vbcast.lane.b32.xlu0 %v1445, %s1506
    %v1508 = vpop.permute.xlu0 %1507
    %v1509 = vlaneseq
    %v1510 = vshrl.u32 %v1509, 7
    %v1511 = vsub.s32 5, %v1510
    %v1512 = vrot.slane %v1172, %v1511
    %1514 = vbcast.lane.b32.xlu0 %v1512, 256
    %v1515 = vpop.permute.xlu0 %1514
    %s1517 = sor.u32 256, 8
    %1518 = vbcast.lane.b32.xlu0 %v1512, %s1517
    %v1519 = vpop.permute.xlu0 %1518
    %s1521 = sor.u32 256, 16
    %1522 = vbcast.lane.b32.xlu0 %v1512, %s1521
    %v1523 = vpop.permute.xlu0 %1522
    %s1525 = sor.u32 256, 24
    %1526 = vbcast.lane.b32.xlu0 %v1512, %s1525
    %v1527 = vpop.permute.xlu0 %1526
    %s1529 = sor.u32 256, 32
    %1530 = vbcast.lane.b32.xlu0 %v1512, %s1529
    %v1531 = vpop.permute.xlu0 %1530
    %s1533 = sor.u32 256, 40
    %1534 = vbcast.lane.b32.xlu0 %v1512, %s1533
    %v1535 = vpop.permute.xlu0 %1534
    %s1537 = sor.u32 256, 48
    %1538 = vbcast.lane.b32.xlu0 %v1512, %s1537
    %v1539 = vpop.permute.xlu0 %1538
    %s1541 = sor.u32 256, 56
    %1542 = vbcast.lane.b32.xlu0 %v1512, %s1541
    %v1543 = vpop.permute.xlu0 %1542
    %s1545 = sor.u32 256, 64
    %1546 = vbcast.lane.b32.xlu0 %v1512, %s1545
    %v1547 = vpop.permute.xlu0 %1546
    %s1549 = sor.u32 256, 72
    %1550 = vbcast.lane.b32.xlu0 %v1512, %s1549
    %v1551 = vpop.permute.xlu0 %1550
    %s1553 = sor.u32 256, 80
    %1554 = vbcast.lane.b32.xlu0 %v1512, %s1553
    %v1555 = vpop.permute.xlu0 %1554
    %s1557 = sor.u32 256, 88
    %1558 = vbcast.lane.b32.xlu0 %v1512, %s1557
    %v1559 = vpop.permute.xlu0 %1558
    %s1561 = sor.u32 256, 96
    %1562 = vbcast.lane.b32.xlu0 %v1512, %s1561
    %v1563 = vpop.permute.xlu0 %1562
    %s1565 = sor.u32 256, 104
    %1566 = vbcast.lane.b32.xlu0 %v1512, %s1565
    %v1567 = vpop.permute.xlu0 %1566
    %s1569 = sor.u32 256, 112
    %1570 = vbcast.lane.b32.xlu0 %v1512, %s1569
    %v1571 = vpop.permute.xlu0 %1570
    %s1573 = sor.u32 256, 120
    %1574 = vbcast.lane.b32.xlu0 %v1512, %s1573
    %v1575 = vpop.permute.xlu0 %1574
    %v1576 = vlaneseq
    %v1577 = vshrl.u32 %v1576, 7
    %v1578 = vsub.s32 6, %v1577
    %v1579 = vrot.slane %v1172, %v1578
    %1581 = vbcast.lane.b32.xlu0 %v1579, 256
    %v1582 = vpop.permute.xlu0 %1581
    %s1584 = sor.u32 256, 8
    %1585 = vbcast.lane.b32.xlu0 %v1579, %s1584
    %v1586 = vpop.permute.xlu0 %1585
    %s1588 = sor.u32 256, 16
    %1589 = vbcast.lane.b32.xlu0 %v1579, %s1588
    %v1590 = vpop.permute.xlu0 %1589
    %s1592 = sor.u32 256, 24
    %1593 = vbcast.lane.b32.xlu0 %v1579, %s1592
    %v1594 = vpop.permute.xlu0 %1593
    %s1596 = sor.u32 256, 32
    %1597 = vbcast.lane.b32.xlu0 %v1579, %s1596
    %v1598 = vpop.permute.xlu0 %1597
    %s1600 = sor.u32 256, 40
    %1601 = vbcast.lane.b32.xlu0 %v1579, %s1600
    %v1602 = vpop.permute.xlu0 %1601
    %s1604 = sor.u32 256, 48
    %1605 = vbcast.lane.b32.xlu0 %v1579, %s1604
    %v1606 = vpop.permute.xlu0 %1605
    %s1608 = sor.u32 256, 56
    %1609 = vbcast.lane.b32.xlu0 %v1579, %s1608
    %v1610 = vpop.permute.xlu0 %1609
    %s1612 = sor.u32 256, 64
    %1613 = vbcast.lane.b32.xlu0 %v1579, %s1612
    %v1614 = vpop.permute.xlu0 %1613
    %s1616 = sor.u32 256, 72
    %1617 = vbcast.lane.b32.xlu0 %v1579, %s1616
    %v1618 = vpop.permute.xlu0 %1617
    %s1620 = sor.u32 256, 80
    %1621 = vbcast.lane.b32.xlu0 %v1579, %s1620
    %v1622 = vpop.permute.xlu0 %1621
    %s1624 = sor.u32 256, 88
    %1625 = vbcast.lane.b32.xlu0 %v1579, %s1624
    %v1626 = vpop.permute.xlu0 %1625
    %s1628 = sor.u32 256, 96
    %1629 = vbcast.lane.b32.xlu0 %v1579, %s1628
    %v1630 = vpop.permute.xlu0 %1629
    %s1632 = sor.u32 256, 104
    %1633 = vbcast.lane.b32.xlu0 %v1579, %s1632
    %v1634 = vpop.permute.xlu0 %1633
    %s1636 = sor.u32 256, 112
    %1637 = vbcast.lane.b32.xlu0 %v1579, %s1636
    %v1638 = vpop.permute.xlu0 %1637
    %s1640 = sor.u32 256, 120
    %1641 = vbcast.lane.b32.xlu0 %v1579, %s1640
    %v1642 = vpop.permute.xlu0 %1641
    %v1643 = vlaneseq
    %v1644 = vshrl.u32 %v1643, 7
    %v1645 = vsub.s32 7, %v1644
    %v1646 = vrot.slane %v1172, %v1645
    %1648 = vbcast.lane.b32.xlu0 %v1646, 256
    %v1649 = vpop.permute.xlu0 %1648
    %s1651 = sor.u32 256, 8
    %1652 = vbcast.lane.b32.xlu0 %v1646, %s1651
    %v1653 = vpop.permute.xlu0 %1652
    %s1655 = sor.u32 256, 16
    %1656 = vbcast.lane.b32.xlu0 %v1646, %s1655
    %v1657 = vpop.permute.xlu0 %1656
    %s1659 = sor.u32 256, 24
    %1660 = vbcast.lane.b32.xlu0 %v1646, %s1659
    %v1661 = vpop.permute.xlu0 %1660
    %s1663 = sor.u32 256, 32
    %1664 = vbcast.lane.b32.xlu0 %v1646, %s1663
    %v1665 = vpop.permute.xlu0 %1664
    %s1667 = sor.u32 256, 40
    %1668 = vbcast.lane.b32.xlu0 %v1646, %s1667
    %v1669 = vpop.permute.xlu0 %1668
    %s1671 = sor.u32 256, 48
    %1672 = vbcast.lane.b32.xlu0 %v1646, %s1671
    %v1673 = vpop.permute.xlu0 %1672
    %s1675 = sor.u32 256, 56
    %1676 = vbcast.lane.b32.xlu0 %v1646, %s1675
    %v1677 = vpop.permute.xlu0 %1676
    %s1679 = sor.u32 256, 64
    %1680 = vbcast.lane.b32.xlu0 %v1646, %s1679
    %v1681 = vpop.permute.xlu0 %1680
    %s1683 = sor.u32 256, 72
    %1684 = vbcast.lane.b32.xlu0 %v1646, %s1683
    %v1685 = vpop.permute.xlu0 %1684
    %s1687 = sor.u32 256, 80
    %1688 = vbcast.lane.b32.xlu0 %v1646, %s1687
    %v1689 = vpop.permute.xlu0 %1688
    %s1691 = sor.u32 256, 88
    %1692 = vbcast.lane.b32.xlu0 %v1646, %s1691
    %v1693 = vpop.permute.xlu0 %1692
    %s1695 = sor.u32 256, 96
    %1696 = vbcast.lane.b32.xlu0 %v1646, %s1695
    %v1697 = vpop.permute.xlu0 %1696
    %s1699 = sor.u32 256, 104
    %1700 = vbcast.lane.b32.xlu0 %v1646, %s1699
    %v1701 = vpop.permute.xlu0 %1700
    %s1703 = sor.u32 256, 112
    %1704 = vbcast.lane.b32.xlu0 %v1646, %s1703
    %v1705 = vpop.permute.xlu0 %1704
    %s1707 = sor.u32 256, 120
    %1708 = vbcast.lane.b32.xlu0 %v1646, %s1707
    %v1709 = vpop.permute.xlu0 %1708
    %v1838 = vsub.f32 %v916, %v1180
    %v1839 = vsub.f32 %v918, %v1184
    %v1840 = vsub.f32 %v920, %v1188
    %v1841 = vsub.f32 %v922, %v1192
    %v1842 = vsub.f32 %v924, %v1196
    %v1843 = vsub.f32 %v926, %v1200
    %v1844 = vsub.f32 %v928, %v1204
    %v1845 = vsub.f32 %v930, %v1208
    %v1846 = vsub.f32 %v932, %v1212
    %v1847 = vsub.f32 %v934, %v1216
    %v1848 = vsub.f32 %v936, %v1220
    %v1849 = vsub.f32 %v938, %v1224
    %v1850 = vsub.f32 %v940, %v1228
    %v1851 = vsub.f32 %v942, %v1232
    %v1852 = vsub.f32 %v944, %v1236
    %v1853 = vsub.f32 %v946, %v1240
    %v1854 = vsub.f32 %v948, %v1247
    %v1855 = vsub.f32 %v950, %v1251
    %v1856 = vsub.f32 %v952, %v1255
    %v1857 = vsub.f32 %v954, %v1259
    %v1858 = vsub.f32 %v956, %v1263
    %v1859 = vsub.f32 %v958, %v1267
    %v1860 = vsub.f32 %v960, %v1271
    %v1861 = vsub.f32 %v962, %v1275
    %v1862 = vsub.f32 %v964, %v1279
    %v1863 = vsub.f32 %v966, %v1283
    %v1864 = vsub.f32 %v968, %v1287
    %v1865 = vsub.f32 %v970, %v1291
    %v1866 = vsub.f32 %v972, %v1295
    %v1867 = vsub.f32 %v974, %v1299
    %v1868 = vsub.f32 %v976, %v1303
    %v1869 = vsub.f32 %v978, %v1307
    %v1870 = vsub.f32 %v980, %v1314
    %v1871 = vsub.f32 %v982, %v1318
    %v1872 = vsub.f32 %v984, %v1322
    %v1873 = vsub.f32 %v986, %v1326
    %v1874 = vsub.f32 %v988, %v1330
    %v1875 = vsub.f32 %v990, %v1334
    %v1876 = vsub.f32 %v992, %v1338
    %v1877 = vsub.f32 %v994, %v1342
    %v1878 = vsub.f32 %v996, %v1346
    %v1879 = vsub.f32 %v998, %v1350
    %v1880 = vsub.f32 %v1000, %v1354
    %v1881 = vsub.f32 %v1002, %v1358
    %v1882 = vsub.f32 %v1004, %v1362
    %v1883 = vsub.f32 %v1006, %v1366
    %v1884 = vsub.f32 %v1008, %v1370
    %v1885 = vsub.f32 %v1010, %v1374
    %v1886 = vsub.f32 %v1012, %v1381
    %v1887 = vsub.f32 %v1014, %v1385
    %v1888 = vsub.f32 %v1016, %v1389
    %v1889 = vsub.f32 %v1018, %v1393
    %v1890 = vsub.f32 %v1020, %v1397
    %v1891 = vsub.f32 %v1022, %v1401
    %v1892 = vsub.f32 %v1024, %v1405
    %v1893 = vsub.f32 %v1026, %v1409
    %v1894 = vsub.f32 %v1028, %v1413
    %v1895 = vsub.f32 %v1030, %v1417
    %v1896 = vsub.f32 %v1032, %v1421
    %v1897 = vsub.f32 %v1034, %v1425
    %v1898 = vsub.f32 %v1036, %v1429
    %v1899 = vsub.f32 %v1038, %v1433
    %v1900 = vsub.f32 %v1040, %v1437
    %v1901 = vsub.f32 %v1042, %v1441
    %v1902 = vsub.f32 %v1044, %v1448
    %v1903 = vsub.f32 %v1046, %v1452
    %v1904 = vsub.f32 %v1048, %v1456
    %v1905 = vsub.f32 %v1050, %v1460
    %v1906 = vsub.f32 %v1052, %v1464
    %v1907 = vsub.f32 %v1054, %v1468
    %v1908 = vsub.f32 %v1056, %v1472
    %v1909 = vsub.f32 %v1058, %v1476
    %v1910 = vsub.f32 %v1060, %v1480
    %v1911 = vsub.f32 %v1062, %v1484
    %v1912 = vsub.f32 %v1064, %v1488
    %v1913 = vsub.f32 %v1066, %v1492
    %v1914 = vsub.f32 %v1068, %v1496
    %v1915 = vsub.f32 %v1070, %v1500
    %v1916 = vsub.f32 %v1072, %v1504
    %v1917 = vsub.f32 %v1074, %v1508
    %v1918 = vsub.f32 %v1076, %v1515
    %v1919 = vsub.f32 %v1078, %v1519
    %v1920 = vsub.f32 %v1080, %v1523
    %v1921 = vsub.f32 %v1082, %v1527
    %v1922 = vsub.f32 %v1084, %v1531
    %v1923 = vsub.f32 %v1086, %v1535
    %v1924 = vsub.f32 %v1088, %v1539
    %v1925 = vsub.f32 %v1090, %v1543
    %v1926 = vsub.f32 %v1092, %v1547
    %v1927 = vsub.f32 %v1094, %v1551
    %v1928 = vsub.f32 %v1096, %v1555
    %v1929 = vsub.f32 %v1098, %v1559
    %v1930 = vsub.f32 %v1100, %v1563
    %v1931 = vsub.f32 %v1102, %v1567
    %v1932 = vsub.f32 %v1104, %v1571
    %v1933 = vsub.f32 %v1106, %v1575
    %v1934 = vsub.f32 %v1108, %v1582
    %v1935 = vsub.f32 %v1110, %v1586
    %v1936 = vsub.f32 %v1112, %v1590
    %v1937 = vsub.f32 %v1114, %v1594
    %v1938 = vsub.f32 %v1116, %v1598
    %v1939 = vsub.f32 %v1118, %v1602
    %v1940 = vsub.f32 %v1120, %v1606
    %v1941 = vsub.f32 %v1122, %v1610
    %v1942 = vsub.f32 %v1124, %v1614
    %v1943 = vsub.f32 %v1126, %v1618
    %v1944 = vsub.f32 %v1128, %v1622
    %v1945 = vsub.f32 %v1130, %v1626
    %v1946 = vsub.f32 %v1132, %v1630
    %v1947 = vsub.f32 %v1134, %v1634
    %v1948 = vsub.f32 %v1136, %v1638
    %v1949 = vsub.f32 %v1138, %v1642
    %v1950 = vsub.f32 %v1140, %v1649
    %v1951 = vsub.f32 %v1142, %v1653
    %v1952 = vsub.f32 %v1144, %v1657
    %v1953 = vsub.f32 %v1146, %v1661
    %v1954 = vsub.f32 %v1148, %v1665
    %v1955 = vsub.f32 %v1150, %v1669
    %v1956 = vsub.f32 %v1152, %v1673
    %v1957 = vsub.f32 %v1154, %v1677
    %v1958 = vsub.f32 %v1156, %v1681
    %v1959 = vsub.f32 %v1158, %v1685
    %v1960 = vsub.f32 %v1160, %v1689
    %v1961 = vsub.f32 %v1162, %v1693
    %v1962 = vsub.f32 %v1164, %v1697
    %v1963 = vsub.f32 %v1166, %v1701
    %v1964 = vsub.f32 %v1168, %v1705
    %v1965 = vsub.f32 %v1170, %v1709
    %vm1966 = vcmp.lt.f32.partialorder %v1838, 2.0
    %vm1967 = vcmp.lt.f32.partialorder %v1839, 2.0
    %vm1968 = vcmp.lt.f32.partialorder %v1840, 2.0
    %vm1969 = vcmp.lt.f32.partialorder %v1841, 2.0
    %vm1970 = vcmp.lt.f32.partialorder %v1842, 2.0
    %vm1971 = vcmp.lt.f32.partialorder %v1843, 2.0
    %vm1972 = vcmp.lt.f32.partialorder %v1844, 2.0
    %vm1973 = vcmp.lt.f32.partialorder %v1845, 2.0
    %vm1974 = vcmp.lt.f32.partialorder %v1846, 2.0
    %vm1975 = vcmp.lt.f32.partialorder %v1847, 2.0
    %vm1976 = vcmp.lt.f32.partialorder %v1848, 2.0
    %vm1977 = vcmp.lt.f32.partialorder %v1849, 2.0
    %vm1978 = vcmp.lt.f32.partialorder %v1850, 2.0
    %vm1979 = vcmp.lt.f32.partialorder %v1851, 2.0
    %vm1980 = vcmp.lt.f32.partialorder %v1852, 2.0
    %vm1981 = vcmp.lt.f32.partialorder %v1853, 2.0
    %vm1982 = vcmp.lt.f32.partialorder %v1854, 2.0
    %vm1983 = vcmp.lt.f32.partialorder %v1855, 2.0
    %vm1984 = vcmp.lt.f32.partialorder %v1856, 2.0
    %vm1985 = vcmp.lt.f32.partialorder %v1857, 2.0
    %vm1986 = vcmp.lt.f32.partialorder %v1858, 2.0
    %vm1987 = vcmp.lt.f32.partialorder %v1859, 2.0
    %vm1988 = vcmp.lt.f32.partialorder %v1860, 2.0
    %vm1989 = vcmp.lt.f32.partialorder %v1861, 2.0
    %vm1990 = vcmp.lt.f32.partialorder %v1862, 2.0
    %vm1991 = vcmp.lt.f32.partialorder %v1863, 2.0
    %vm1992 = vcmp.lt.f32.partialorder %v1864, 2.0
    %vm1993 = vcmp.lt.f32.partialorder %v1865, 2.0
    %vm1994 = vcmp.lt.f32.partialorder %v1866, 2.0
    %vm1995 = vcmp.lt.f32.partialorder %v1867, 2.0
    %vm1996 = vcmp.lt.f32.partialorder %v1868, 2.0
    %vm1997 = vcmp.lt.f32.partialorder %v1869, 2.0
    %vm1998 = vcmp.lt.f32.partialorder %v1870, 2.0
    %vm1999 = vcmp.lt.f32.partialorder %v1871, 2.0
    %vm2000 = vcmp.lt.f32.partialorder %v1872, 2.0
    %vm2001 = vcmp.lt.f32.partialorder %v1873, 2.0
    %vm2002 = vcmp.lt.f32.partialorder %v1874, 2.0
    %vm2003 = vcmp.lt.f32.partialorder %v1875, 2.0
    %vm2004 = vcmp.lt.f32.partialorder %v1876, 2.0
    %vm2005 = vcmp.lt.f32.partialorder %v1877, 2.0
    %vm2006 = vcmp.lt.f32.partialorder %v1878, 2.0
    %vm2007 = vcmp.lt.f32.partialorder %v1879, 2.0
    %vm2008 = vcmp.lt.f32.partialorder %v1880, 2.0
    %vm2009 = vcmp.lt.f32.partialorder %v1881, 2.0
    %vm2010 = vcmp.lt.f32.partialorder %v1882, 2.0
    %vm2011 = vcmp.lt.f32.partialorder %v1883, 2.0
    %vm2012 = vcmp.lt.f32.partialorder %v1884, 2.0
    %vm2013 = vcmp.lt.f32.partialorder %v1885, 2.0
    %vm2014 = vcmp.lt.f32.partialorder %v1886, 2.0
    %vm2015 = vcmp.lt.f32.partialorder %v1887, 2.0
    %vm2016 = vcmp.lt.f32.partialorder %v1888, 2.0
    %vm2017 = vcmp.lt.f32.partialorder %v1889, 2.0
    %vm2018 = vcmp.lt.f32.partialorder %v1890, 2.0
    %vm2019 = vcmp.lt.f32.partialorder %v1891, 2.0
    %vm2020 = vcmp.lt.f32.partialorder %v1892, 2.0
    %vm2021 = vcmp.lt.f32.partialorder %v1893, 2.0
    %vm2022 = vcmp.lt.f32.partialorder %v1894, 2.0
    %vm2023 = vcmp.lt.f32.partialorder %v1895, 2.0
    %vm2024 = vcmp.lt.f32.partialorder %v1896, 2.0
    %vm2025 = vcmp.lt.f32.partialorder %v1897, 2.0
    %vm2026 = vcmp.lt.f32.partialorder %v1898, 2.0
    %vm2027 = vcmp.lt.f32.partialorder %v1899, 2.0
    %vm2028 = vcmp.lt.f32.partialorder %v1900, 2.0
    %vm2029 = vcmp.lt.f32.partialorder %v1901, 2.0
    %vm2030 = vcmp.lt.f32.partialorder %v1902, 2.0
    %vm2031 = vcmp.lt.f32.partialorder %v1903, 2.0
    %vm2032 = vcmp.lt.f32.partialorder %v1904, 2.0
    %vm2033 = vcmp.lt.f32.partialorder %v1905, 2.0
    %vm2034 = vcmp.lt.f32.partialorder %v1906, 2.0
    %vm2035 = vcmp.lt.f32.partialorder %v1907, 2.0
    %vm2036 = vcmp.lt.f32.partialorder %v1908, 2.0
    %vm2037 = vcmp.lt.f32.partialorder %v1909, 2.0
    %vm2038 = vcmp.lt.f32.partialorder %v1910, 2.0
    %vm2039 = vcmp.lt.f32.partialorder %v1911, 2.0
    %vm2040 = vcmp.lt.f32.partialorder %v1912, 2.0
    %vm2041 = vcmp.lt.f32.partialorder %v1913, 2.0
    %vm2042 = vcmp.lt.f32.partialorder %v1914, 2.0
    %vm2043 = vcmp.lt.f32.partialorder %v1915, 2.0
    %vm2044 = vcmp.lt.f32.partialorder %v1916, 2.0
    %vm2045 = vcmp.lt.f32.partialorder %v1917, 2.0
    %vm2046 = vcmp.lt.f32.partialorder %v1918, 2.0
    %vm2047 = vcmp.lt.f32.partialorder %v1919, 2.0
    %vm2048 = vcmp.lt.f32.partialorder %v1920, 2.0
    %vm2049 = vcmp.lt.f32.partialorder %v1921, 2.0
    %vm2050 = vcmp.lt.f32.partialorder %v1922, 2.0
    %vm2051 = vcmp.lt.f32.partialorder %v1923, 2.0
    %vm2052 = vcmp.lt.f32.partialorder %v1924, 2.0
    %vm2053 = vcmp.lt.f32.partialorder %v1925, 2.0
    %vm2054 = vcmp.lt.f32.partialorder %v1926, 2.0
    %vm2055 = vcmp.lt.f32.partialorder %v1927, 2.0
    %vm2056 = vcmp.lt.f32.partialorder %v1928, 2.0
    %vm2057 = vcmp.lt.f32.partialorder %v1929, 2.0
    %vm2058 = vcmp.lt.f32.partialorder %v1930, 2.0
    %vm2059 = vcmp.lt.f32.partialorder %v1931, 2.0
    %vm2060 = vcmp.lt.f32.partialorder %v1932, 2.0
    %vm2061 = vcmp.lt.f32.partialorder %v1933, 2.0
    %vm2062 = vcmp.lt.f32.partialorder %v1934, 2.0
    %vm2063 = vcmp.lt.f32.partialorder %v1935, 2.0
    %vm2064 = vcmp.lt.f32.partialorder %v1936, 2.0
    %vm2065 = vcmp.lt.f32.partialorder %v1937, 2.0
    %vm2066 = vcmp.lt.f32.partialorder %v1938, 2.0
    %vm2067 = vcmp.lt.f32.partialorder %v1939, 2.0
    %vm2068 = vcmp.lt.f32.partialorder %v1940, 2.0
    %vm2069 = vcmp.lt.f32.partialorder %v1941, 2.0
    %vm2070 = vcmp.lt.f32.partialorder %v1942, 2.0
    %vm2071 = vcmp.lt.f32.partialorder %v1943, 2.0
    %vm2072 = vcmp.lt.f32.partialorder %v1944, 2.0
    %vm2073 = vcmp.lt.f32.partialorder %v1945, 2.0
    %vm2074 = vcmp.lt.f32.partialorder %v1946, 2.0
    %vm2075 = vcmp.lt.f32.partialorder %v1947, 2.0
    %vm2076 = vcmp.lt.f32.partialorder %v1948, 2.0
    %vm2077 = vcmp.lt.f32.partialorder %v1949, 2.0
    %vm2078 = vcmp.lt.f32.partialorder %v1950, 2.0
    %vm2079 = vcmp.lt.f32.partialorder %v1951, 2.0
    %vm2080 = vcmp.lt.f32.partialorder %v1952, 2.0
    %vm2081 = vcmp.lt.f32.partialorder %v1953, 2.0
    %vm2082 = vcmp.lt.f32.partialorder %v1954, 2.0
    %vm2083 = vcmp.lt.f32.partialorder %v1955, 2.0
    %vm2084 = vcmp.lt.f32.partialorder %v1956, 2.0
    %vm2085 = vcmp.lt.f32.partialorder %v1957, 2.0
    %vm2086 = vcmp.lt.f32.partialorder %v1958, 2.0
    %vm2087 = vcmp.lt.f32.partialorder %v1959, 2.0
    %vm2088 = vcmp.lt.f32.partialorder %v1960, 2.0
    %vm2089 = vcmp.lt.f32.partialorder %v1961, 2.0
    %vm2090 = vcmp.lt.f32.partialorder %v1962, 2.0
    %vm2091 = vcmp.lt.f32.partialorder %v1963, 2.0
    %vm2092 = vcmp.lt.f32.partialorder %v1964, 2.0
    %vm2093 = vcmp.lt.f32.partialorder %v1965, 2.0
    %v2094 = vlaneseq
    %v2095 = vand.u32 %v2094, 127
    %v2096 = vstv %s27
    %v2097 = vadd.s32 %v2095, %v2096
    %vm2098 = vcmp.lt.s32.totalorder %v2097, 16
    %v2099 = vsel %vm2098, 1, 0
    %2101 = vbcast.lane.b32.xlu0 %v2099, 256
    %v2102 = vpop.permute.xlu0 %2101
    %s2104 = sor.u32 256, 8
    %2105 = vbcast.lane.b32.xlu0 %v2099, %s2104
    %v2106 = vpop.permute.xlu0 %2105
    %s2108 = sor.u32 256, 16
    %2109 = vbcast.lane.b32.xlu0 %v2099, %s2108
    %v2110 = vpop.permute.xlu0 %2109
    %s2112 = sor.u32 256, 24
    %2113 = vbcast.lane.b32.xlu0 %v2099, %s2112
    %v2114 = vpop.permute.xlu0 %2113
    %s2116 = sor.u32 256, 32
    %2117 = vbcast.lane.b32.xlu0 %v2099, %s2116
    %v2118 = vpop.permute.xlu0 %2117
    %s2120 = sor.u32 256, 40
    %2121 = vbcast.lane.b32.xlu0 %v2099, %s2120
    %v2122 = vpop.permute.xlu0 %2121
    %s2124 = sor.u32 256, 48
    %2125 = vbcast.lane.b32.xlu0 %v2099, %s2124
    %v2126 = vpop.permute.xlu0 %2125
    %s2128 = sor.u32 256, 56
    %2129 = vbcast.lane.b32.xlu0 %v2099, %s2128
    %v2130 = vpop.permute.xlu0 %2129
    %s2132 = sor.u32 256, 64
    %2133 = vbcast.lane.b32.xlu0 %v2099, %s2132
    %v2134 = vpop.permute.xlu0 %2133
    %s2136 = sor.u32 256, 72
    %2137 = vbcast.lane.b32.xlu0 %v2099, %s2136
    %v2138 = vpop.permute.xlu0 %2137
    %s2140 = sor.u32 256, 80
    %2141 = vbcast.lane.b32.xlu0 %v2099, %s2140
    %v2142 = vpop.permute.xlu0 %2141
    %s2144 = sor.u32 256, 88
    %2145 = vbcast.lane.b32.xlu0 %v2099, %s2144
    %v2146 = vpop.permute.xlu0 %2145
    %s2148 = sor.u32 256, 96
    %2149 = vbcast.lane.b32.xlu0 %v2099, %s2148
    %v2150 = vpop.permute.xlu0 %2149
    %s2152 = sor.u32 256, 104
    %2153 = vbcast.lane.b32.xlu0 %v2099, %s2152
    %v2154 = vpop.permute.xlu0 %2153
    %s2156 = sor.u32 256, 112
    %2157 = vbcast.lane.b32.xlu0 %v2099, %s2156
    %v2158 = vpop.permute.xlu0 %2157
    %s2160 = sor.u32 256, 120
    %2161 = vbcast.lane.b32.xlu0 %v2099, %s2160
    %v2162 = vpop.permute.xlu0 %2161
    %vm2163 = vcmp.ne.s32.totalorder %v2102, 0
    %vm2164 = vcmp.ne.s32.totalorder %v2106, 0
    %vm2165 = vcmp.ne.s32.totalorder %v2110, 0
    %vm2166 = vcmp.ne.s32.totalorder %v2114, 0
    %vm2167 = vcmp.ne.s32.totalorder %v2118, 0
    %vm2168 = vcmp.ne.s32.totalorder %v2122, 0
    %vm2169 = vcmp.ne.s32.totalorder %v2126, 0
    %vm2170 = vcmp.ne.s32.totalorder %v2130, 0
    %vm2171 = vcmp.ne.s32.totalorder %v2134, 0
    %vm2172 = vcmp.ne.s32.totalorder %v2138, 0
    %vm2173 = vcmp.ne.s32.totalorder %v2142, 0
    %vm2174 = vcmp.ne.s32.totalorder %v2146, 0
    %vm2175 = vcmp.ne.s32.totalorder %v2150, 0
    %vm2176 = vcmp.ne.s32.totalorder %v2154, 0
    %vm2177 = vcmp.ne.s32.totalorder %v2158, 0
    %vm2178 = vcmp.ne.s32.totalorder %v2162, 0
    %vm2179 = vmand %vm1966, %vm2163
    %vm2180 = vmand %vm1967, %vm2164
    %vm2181 = vmand %vm1968, %vm2165
    %vm2182 = vmand %vm1969, %vm2166
    %vm2183 = vmand %vm1970, %vm2167
    %vm2184 = vmand %vm1971, %vm2168
    %vm2185 = vmand %vm1972, %vm2169
    %vm2186 = vmand %vm1973, %vm2170
    %vm2187 = vmand %vm1974, %vm2171
    %vm2188 = vmand %vm1975, %vm2172
    %vm2189 = vmand %vm1976, %vm2173
    %vm2190 = vmand %vm1977, %vm2174
    %vm2191 = vmand %vm1978, %vm2175
    %vm2192 = vmand %vm1979, %vm2176
    %vm2193 = vmand %vm1980, %vm2177
    %vm2194 = vmand %vm1981, %vm2178
    %vm2195 = vmand %vm1982, %vm2163
    %vm2196 = vmand %vm1983, %vm2164
    %vm2197 = vmand %vm1984, %vm2165
    %vm2198 = vmand %vm1985, %vm2166
    %vm2199 = vmand %vm1986, %vm2167
    %vm2200 = vmand %vm1987, %vm2168
    %vm2201 = vmand %vm1988, %vm2169
    %vm2202 = vmand %vm1989, %vm2170
    %vm2203 = vmand %vm1990, %vm2171
    %vm2204 = vmand %vm1991, %vm2172
    %vm2205 = vmand %vm1992, %vm2173
    %vm2206 = vmand %vm1993, %vm2174
    %vm2207 = vmand %vm1994, %vm2175
    %vm2208 = vmand %vm1995, %vm2176
    %vm2209 = vmand %vm1996, %vm2177
    %vm2210 = vmand %vm1997, %vm2178
    %vm2211 = vmand %vm1998, %vm2163
    %vm2212 = vmand %vm1999, %vm2164
    %vm2213 = vmand %vm2000, %vm2165
    %vm2214 = vmand %vm2001, %vm2166
    %vm2215 = vmand %vm2002, %vm2167
    %vm2216 = vmand %vm2003, %vm2168
    %vm2217 = vmand %vm2004, %vm2169
    %vm2218 = vmand %vm2005, %vm2170
    %vm2219 = vmand %vm2006, %vm2171
    %vm2220 = vmand %vm2007, %vm2172
    %vm2221 = vmand %vm2008, %vm2173
    %vm2222 = vmand %vm2009, %vm2174
    %vm2223 = vmand %vm2010, %vm2175
    %vm2224 = vmand %vm2011, %vm2176
    %vm2225 = vmand %vm2012, %vm2177
    %vm2226 = vmand %vm2013, %vm2178
    %vm2227 = vmand %vm2014, %vm2163
    %vm2228 = vmand %vm2015, %vm2164
    %vm2229 = vmand %vm2016, %vm2165
    %vm2230 = vmand %vm2017, %vm2166
    %vm2231 = vmand %vm2018, %vm2167
    %vm2232 = vmand %vm2019, %vm2168
    %vm2233 = vmand %vm2020, %vm2169
    %vm2234 = vmand %vm2021, %vm2170
    %vm2235 = vmand %vm2022, %vm2171
    %vm2236 = vmand %vm2023, %vm2172
    %vm2237 = vmand %vm2024, %vm2173
    %vm2238 = vmand %vm2025, %vm2174
    %vm2239 = vmand %vm2026, %vm2175
    %vm2240 = vmand %vm2027, %vm2176
    %vm2241 = vmand %vm2028, %vm2177
    %vm2242 = vmand %vm2029, %vm2178
    %vm2243 = vmand %vm2030, %vm2163
    %vm2244 = vmand %vm2031, %vm2164
    %vm2245 = vmand %vm2032, %vm2165
    %vm2246 = vmand %vm2033, %vm2166
    %vm2247 = vmand %vm2034, %vm2167
    %vm2248 = vmand %vm2035, %vm2168
    %vm2249 = vmand %vm2036, %vm2169
    %vm2250 = vmand %vm2037, %vm2170
    %vm2251 = vmand %vm2038, %vm2171
    %vm2252 = vmand %vm2039, %vm2172
    %vm2253 = vmand %vm2040, %vm2173
    %vm2254 = vmand %vm2041, %vm2174
    %vm2255 = vmand %vm2042, %vm2175
    %vm2256 = vmand %vm2043, %vm2176
    %vm2257 = vmand %vm2044, %vm2177
    %vm2258 = vmand %vm2045, %vm2178
    %vm2259 = vmand %vm2046, %vm2163
    %vm2260 = vmand %vm2047, %vm2164
    %vm2261 = vmand %vm2048, %vm2165
    %vm2262 = vmand %vm2049, %vm2166
    %vm2263 = vmand %vm2050, %vm2167
    %vm2264 = vmand %vm2051, %vm2168
    %vm2265 = vmand %vm2052, %vm2169
    %vm2266 = vmand %vm2053, %vm2170
    %vm2267 = vmand %vm2054, %vm2171
    %vm2268 = vmand %vm2055, %vm2172
    %vm2269 = vmand %vm2056, %vm2173
    %vm2270 = vmand %vm2057, %vm2174
    %vm2271 = vmand %vm2058, %vm2175
    %vm2272 = vmand %vm2059, %vm2176
    %vm2273 = vmand %vm2060, %vm2177
    %vm2274 = vmand %vm2061, %vm2178
    %vm2275 = vmand %vm2062, %vm2163
    %vm2276 = vmand %vm2063, %vm2164
    %vm2277 = vmand %vm2064, %vm2165
    %vm2278 = vmand %vm2065, %vm2166
    %vm2279 = vmand %vm2066, %vm2167
    %vm2280 = vmand %vm2067, %vm2168
    %vm2281 = vmand %vm2068, %vm2169
    %vm2282 = vmand %vm2069, %vm2170
    %vm2283 = vmand %vm2070, %vm2171
    %vm2284 = vmand %vm2071, %vm2172
    %vm2285 = vmand %vm2072, %vm2173
    %vm2286 = vmand %vm2073, %vm2174
    %vm2287 = vmand %vm2074, %vm2175
    %vm2288 = vmand %vm2075, %vm2176
    %vm2289 = vmand %vm2076, %vm2177
    %vm2290 = vmand %vm2077, %vm2178
    %vm2291 = vmand %vm2078, %vm2163
    %vm2292 = vmand %vm2079, %vm2164
    %vm2293 = vmand %vm2080, %vm2165
    %vm2294 = vmand %vm2081, %vm2166
    %vm2295 = vmand %vm2082, %vm2167
    %vm2296 = vmand %vm2083, %vm2168
    %vm2297 = vmand %vm2084, %vm2169
    %vm2298 = vmand %vm2085, %vm2170
    %vm2299 = vmand %vm2086, %vm2171
    %vm2300 = vmand %vm2087, %vm2172
    %vm2301 = vmand %vm2088, %vm2173
    %vm2302 = vmand %vm2089, %vm2174
    %vm2303 = vmand %vm2090, %vm2175
    %vm2304 = vmand %vm2091, %vm2176
    %vm2305 = vmand %vm2092, %vm2177
    %vm2306 = vmand %vm2093, %vm2178
    %v2307 = vsel %vm2179, 0.1, 0.0
    %v2308 = vsel %vm2180, 0.1, 0.0
    %v2309 = vsel %vm2181, 0.1, 0.0
    %v2310 = vsel %vm2182, 0.1, 0.0
    %v2311 = vsel %vm2183, 0.1, 0.0
    %v2312 = vsel %vm2184, 0.1, 0.0
    %v2313 = vsel %vm2185, 0.1, 0.0
    %v2314 = vsel %vm2186, 0.1, 0.0
    %v2315 = vsel %vm2187, 0.1, 0.0
    %v2316 = vsel %vm2188, 0.1, 0.0
    %v2317 = vsel %vm2189, 0.1, 0.0
    %v2318 = vsel %vm2190, 0.1, 0.0
    %v2319 = vsel %vm2191, 0.1, 0.0
    %v2320 = vsel %vm2192, 0.1, 0.0
    %v2321 = vsel %vm2193, 0.1, 0.0
    %v2322 = vsel %vm2194, 0.1, 0.0
    %v2323 = vsel %vm2195, 0.1, 0.0
    %v2324 = vsel %vm2196, 0.1, 0.0
    %v2325 = vsel %vm2197, 0.1, 0.0
    %v2326 = vsel %vm2198, 0.1, 0.0
    %v2327 = vsel %vm2199, 0.1, 0.0
    %v2328 = vsel %vm2200, 0.1, 0.0
    %v2329 = vsel %vm2201, 0.1, 0.0
    %v2330 = vsel %vm2202, 0.1, 0.0
    %v2331 = vsel %vm2203, 0.1, 0.0
    %v2332 = vsel %vm2204, 0.1, 0.0
    %v2333 = vsel %vm2205, 0.1, 0.0
    %v2334 = vsel %vm2206, 0.1, 0.0
    %v2335 = vsel %vm2207, 0.1, 0.0
    %v2336 = vsel %vm2208, 0.1, 0.0
    %v2337 = vsel %vm2209, 0.1, 0.0
    %v2338 = vsel %vm2210, 0.1, 0.0
    %v2339 = vsel %vm2211, 0.1, 0.0
    %v2340 = vsel %vm2212, 0.1, 0.0
    %v2341 = vsel %vm2213, 0.1, 0.0
    %v2342 = vsel %vm2214, 0.1, 0.0
    %v2343 = vsel %vm2215, 0.1, 0.0
    %v2344 = vsel %vm2216, 0.1, 0.0
    %v2345 = vsel %vm2217, 0.1, 0.0
    %v2346 = vsel %vm2218, 0.1, 0.0
    %v2347 = vsel %vm2219, 0.1, 0.0
    %v2348 = vsel %vm2220, 0.1, 0.0
    %v2349 = vsel %vm2221, 0.1, 0.0
    %v2350 = vsel %vm2222, 0.1, 0.0
    %v2351 = vsel %vm2223, 0.1, 0.0
    %v2352 = vsel %vm2224, 0.1, 0.0
    %v2353 = vsel %vm2225, 0.1, 0.0
    %v2354 = vsel %vm2226, 0.1, 0.0
    %v2355 = vsel %vm2227, 0.1, 0.0
    %v2356 = vsel %vm2228, 0.1, 0.0
    %v2357 = vsel %vm2229, 0.1, 0.0
    %v2358 = vsel %vm2230, 0.1, 0.0
    %v2359 = vsel %vm2231, 0.1, 0.0
    %v2360 = vsel %vm2232, 0.1, 0.0
    %v2361 = vsel %vm2233, 0.1, 0.0
    %v2362 = vsel %vm2234, 0.1, 0.0
    %v2363 = vsel %vm2235, 0.1, 0.0
    %v2364 = vsel %vm2236, 0.1, 0.0
    %v2365 = vsel %vm2237, 0.1, 0.0
    %v2366 = vsel %vm2238, 0.1, 0.0
    %v2367 = vsel %vm2239, 0.1, 0.0
    %v2368 = vsel %vm2240, 0.1, 0.0
    %v2369 = vsel %vm2241, 0.1, 0.0
    %v2370 = vsel %vm2242, 0.1, 0.0
    %v2371 = vsel %vm2243, 0.1, 0.0
    %v2372 = vsel %vm2244, 0.1, 0.0
    %v2373 = vsel %vm2245, 0.1, 0.0
    %v2374 = vsel %vm2246, 0.1, 0.0
    %v2375 = vsel %vm2247, 0.1, 0.0
    %v2376 = vsel %vm2248, 0.1, 0.0
    %v2377 = vsel %vm2249, 0.1, 0.0
    %v2378 = vsel %vm2250, 0.1, 0.0
    %v2379 = vsel %vm2251, 0.1, 0.0
    %v2380 = vsel %vm2252, 0.1, 0.0
    %v2381 = vsel %vm2253, 0.1, 0.0
    %v2382 = vsel %vm2254, 0.1, 0.0
    %v2383 = vsel %vm2255, 0.1, 0.0
    %v2384 = vsel %vm2256, 0.1, 0.0
    %v2385 = vsel %vm2257, 0.1, 0.0
    %v2386 = vsel %vm2258, 0.1, 0.0
    %v2387 = vsel %vm2259, 0.1, 0.0
    %v2388 = vsel %vm2260, 0.1, 0.0
    %v2389 = vsel %vm2261, 0.1, 0.0
    %v2390 = vsel %vm2262, 0.1, 0.0
    %v2391 = vsel %vm2263, 0.1, 0.0
    %v2392 = vsel %vm2264, 0.1, 0.0
    %v2393 = vsel %vm2265, 0.1, 0.0
    %v2394 = vsel %vm2266, 0.1, 0.0
    %v2395 = vsel %vm2267, 0.1, 0.0
    %v2396 = vsel %vm2268, 0.1, 0.0
    %v2397 = vsel %vm2269, 0.1, 0.0
    %v2398 = vsel %vm2270, 0.1, 0.0
    %v2399 = vsel %vm2271, 0.1, 0.0
    %v2400 = vsel %vm2272, 0.1, 0.0
    %v2401 = vsel %vm2273, 0.1, 0.0
    %v2402 = vsel %vm2274, 0.1, 0.0
    %v2403 = vsel %vm2275, 0.1, 0.0
    %v2404 = vsel %vm2276, 0.1, 0.0
    %v2405 = vsel %vm2277, 0.1, 0.0
    %v2406 = vsel %vm2278, 0.1, 0.0
    %v2407 = vsel %vm2279, 0.1, 0.0
    %v2408 = vsel %vm2280, 0.1, 0.0
    %v2409 = vsel %vm2281, 0.1, 0.0
    %v2410 = vsel %vm2282, 0.1, 0.0
    %v2411 = vsel %vm2283, 0.1, 0.0
    %v2412 = vsel %vm2284, 0.1, 0.0
    %v2413 = vsel %vm2285, 0.1, 0.0
    %v2414 = vsel %vm2286, 0.1, 0.0
    %v2415 = vsel %vm2287, 0.1, 0.0
    %v2416 = vsel %vm2288, 0.1, 0.0
    %v2417 = vsel %vm2289, 0.1, 0.0
    %v2418 = vsel %vm2290, 0.1, 0.0
    %v2419 = vsel %vm2291, 0.1, 0.0
    %v2420 = vsel %vm2292, 0.1, 0.0
    %v2421 = vsel %vm2293, 0.1, 0.0
    %v2422 = vsel %vm2294, 0.1, 0.0
    %v2423 = vsel %vm2295, 0.1, 0.0
    %v2424 = vsel %vm2296, 0.1, 0.0
    %v2425 = vsel %vm2297, 0.1, 0.0
    %v2426 = vsel %vm2298, 0.1, 0.0
    %v2427 = vsel %vm2299, 0.1, 0.0
    %v2428 = vsel %vm2300, 0.1, 0.0
    %v2429 = vsel %vm2301, 0.1, 0.0
    %v2430 = vsel %vm2302, 0.1, 0.0
    %v2431 = vsel %vm2303, 0.1, 0.0
    %v2432 = vsel %vm2304, 0.1, 0.0
    %v2433 = vsel %vm2305, 0.1, 0.0
    %v2434 = vsel %vm2306, 0.1, 0.0
    %v2435 = vld [vmem:[#allocation2] sm:$0xff]
    %2564 = vset.pattern.permute.xlu0 0
    %2565 = vperm.xlu0 %2564, %v2307
    %v2566 = vpop.permute.xlu0 %2565
    %2567 = vset.pattern.permute.xlu0 0
    %2568 = vperm.xlu0 %2567, %v2308
    %v2569 = vpop.permute.xlu0 %2568
    %2570 = vset.pattern.permute.xlu0 0
    %2571 = vperm.xlu0 %2570, %v2309
    %v2572 = vpop.permute.xlu0 %2571
    %2573 = vset.pattern.permute.xlu0 0
    %2574 = vperm.xlu0 %2573, %v2310
    %v2575 = vpop.permute.xlu0 %2574
    %2576 = vset.pattern.permute.xlu0 0
    %2577 = vperm.xlu0 %2576, %v2311
    %v2578 = vpop.permute.xlu0 %2577
    %2579 = vset.pattern.permute.xlu0 0
    %2580 = vperm.xlu0 %2579, %v2312
    %v2581 = vpop.permute.xlu0 %2580
    %2582 = vset.pattern.permute.xlu0 0
    %2583 = vperm.xlu0 %2582, %v2313
    %v2584 = vpop.permute.xlu0 %2583
    %2585 = vset.pattern.permute.xlu0 0
    %2586 = vperm.xlu0 %2585, %v2314
    %v2587 = vpop.permute.xlu0 %2586
    %2588 = vset.pattern.permute.xlu0 0
    %2589 = vperm.xlu0 %2588, %v2315
    %v2590 = vpop.permute.xlu0 %2589
    %2591 = vset.pattern.permute.xlu0 0
    %2592 = vperm.xlu0 %2591, %v2316
    %v2593 = vpop.permute.xlu0 %2592
    %2594 = vset.pattern.permute.xlu0 0
    %2595 = vperm.xlu0 %2594, %v2317
    %v2596 = vpop.permute.xlu0 %2595
    %2597 = vset.pattern.permute.xlu0 0
    %2598 = vperm.xlu0 %2597, %v2318
    %v2599 = vpop.permute.xlu0 %2598
    %2600 = vset.pattern.permute.xlu0 0
    %2601 = vperm.xlu0 %2600, %v2319
    %v2602 = vpop.permute.xlu0 %2601
    %2603 = vset.pattern.permute.xlu0 0
    %2604 = vperm.xlu0 %2603, %v2320
    %v2605 = vpop.permute.xlu0 %2604
    %2606 = vset.pattern.permute.xlu0 0
    %2607 = vperm.xlu0 %2606, %v2321
    %v2608 = vpop.permute.xlu0 %2607
    %2609 = vset.pattern.permute.xlu0 0
    %2610 = vperm.xlu0 %2609, %v2322
    %v2611 = vpop.permute.xlu0 %2610
    %2612 = vset.pattern.permute.xlu0 0
    %2613 = vperm.xlu0 %2612, %v2323
    %v2614 = vpop.permute.xlu0 %2613
    %2615 = vset.pattern.permute.xlu0 0
    %2616 = vperm.xlu0 %2615, %v2324
    %v2617 = vpop.permute.xlu0 %2616
    %2618 = vset.pattern.permute.xlu0 0
    %2619 = vperm.xlu0 %2618, %v2325
    %v2620 = vpop.permute.xlu0 %2619
    %2621 = vset.pattern.permute.xlu0 0
    %2622 = vperm.xlu0 %2621, %v2326
    %v2623 = vpop.permute.xlu0 %2622
    %2624 = vset.pattern.permute.xlu0 0
    %2625 = vperm.xlu0 %2624, %v2327
    %v2626 = vpop.permute.xlu0 %2625
    %2627 = vset.pattern.permute.xlu0 0
    %2628 = vperm.xlu0 %2627, %v2328
    %v2629 = vpop.permute.xlu0 %2628
    %2630 = vset.pattern.permute.xlu0 0
    %2631 = vperm.xlu0 %2630, %v2329
    %v2632 = vpop.permute.xlu0 %2631
    %2633 = vset.pattern.permute.xlu0 0
    %2634 = vperm.xlu0 %2633, %v2330
    %v2635 = vpop.permute.xlu0 %2634
    %2636 = vset.pattern.permute.xlu0 0
    %2637 = vperm.xlu0 %2636, %v2331
    %v2638 = vpop.permute.xlu0 %2637
    %2639 = vset.pattern.permute.xlu0 0
    %2640 = vperm.xlu0 %2639, %v2332
    %v2641 = vpop.permute.xlu0 %2640
    %2642 = vset.pattern.permute.xlu0 0
    %2643 = vperm.xlu0 %2642, %v2333
    %v2644 = vpop.permute.xlu0 %2643
    %2645 = vset.pattern.permute.xlu0 0
    %2646 = vperm.xlu0 %2645, %v2334
    %v2647 = vpop.permute.xlu0 %2646
    %2648 = vset.pattern.permute.xlu0 0
    %2649 = vperm.xlu0 %2648, %v2335
    %v2650 = vpop.permute.xlu0 %2649
    %2651 = vset.pattern.permute.xlu0 0
    %2652 = vperm.xlu0 %2651, %v2336
    %v2653 = vpop.permute.xlu0 %2652
    %2654 = vset.pattern.permute.xlu0 0
    %2655 = vperm.xlu0 %2654, %v2337
    %v2656 = vpop.permute.xlu0 %2655
    %2657 = vset.pattern.permute.xlu0 0
    %2658 = vperm.xlu0 %2657, %v2338
    %v2659 = vpop.permute.xlu0 %2658
    %2660 = vset.pattern.permute.xlu0 0
    %2661 = vperm.xlu0 %2660, %v2339
    %v2662 = vpop.permute.xlu0 %2661
    %2663 = vset.pattern.permute.xlu0 0
    %2664 = vperm.xlu0 %2663, %v2340
    %v2665 = vpop.permute.xlu0 %2664
    %2666 = vset.pattern.permute.xlu0 0
    %2667 = vperm.xlu0 %2666, %v2341
    %v2668 = vpop.permute.xlu0 %2667
    %2669 = vset.pattern.permute.xlu0 0
    %2670 = vperm.xlu0 %2669, %v2342
    %v2671 = vpop.permute.xlu0 %2670
    %2672 = vset.pattern.permute.xlu0 0
    %2673 = vperm.xlu0 %2672, %v2343
    %v2674 = vpop.permute.xlu0 %2673
    %2675 = vset.pattern.permute.xlu0 0
    %2676 = vperm.xlu0 %2675, %v2344
    %v2677 = vpop.permute.xlu0 %2676
    %2678 = vset.pattern.permute.xlu0 0
    %2679 = vperm.xlu0 %2678, %v2345
    %v2680 = vpop.permute.xlu0 %2679
    %2681 = vset.pattern.permute.xlu0 0
    %2682 = vperm.xlu0 %2681, %v2346
    %v2683 = vpop.permute.xlu0 %2682
    %2684 = vset.pattern.permute.xlu0 0
    %2685 = vperm.xlu0 %2684, %v2347
    %v2686 = vpop.permute.xlu0 %2685
    %2687 = vset.pattern.permute.xlu0 0
    %2688 = vperm.xlu0 %2687, %v2348
    %v2689 = vpop.permute.xlu0 %2688
    %2690 = vset.pattern.permute.xlu0 0
    %2691 = vperm.xlu0 %2690, %v2349
    %v2692 = vpop.permute.xlu0 %2691
    %2693 = vset.pattern.permute.xlu0 0
    %2694 = vperm.xlu0 %2693, %v2350
    %v2695 = vpop.permute.xlu0 %2694
    %2696 = vset.pattern.permute.xlu0 0
    %2697 = vperm.xlu0 %2696, %v2351
    %v2698 = vpop.permute.xlu0 %2697
    %2699 = vset.pattern.permute.xlu0 0
    %2700 = vperm.xlu0 %2699, %v2352
    %v2701 = vpop.permute.xlu0 %2700
    %2702 = vset.pattern.permute.xlu0 0
    %2703 = vperm.xlu0 %2702, %v2353
    %v2704 = vpop.permute.xlu0 %2703
    %2705 = vset.pattern.permute.xlu0 0
    %2706 = vperm.xlu0 %2705, %v2354
    %v2707 = vpop.permute.xlu0 %2706
    %2708 = vset.pattern.permute.xlu0 0
    %2709 = vperm.xlu0 %2708, %v2355
    %v2710 = vpop.permute.xlu0 %2709
    %2711 = vset.pattern.permute.xlu0 0
    %2712 = vperm.xlu0 %2711, %v2356
    %v2713 = vpop.permute.xlu0 %2712
    %2714 = vset.pattern.permute.xlu0 0
    %2715 = vperm.xlu0 %2714, %v2357
    %v2716 = vpop.permute.xlu0 %2715
    %2717 = vset.pattern.permute.xlu0 0
    %2718 = vperm.xlu0 %2717, %v2358
    %v2719 = vpop.permute.xlu0 %2718
    %2720 = vset.pattern.permute.xlu0 0
    %2721 = vperm.xlu0 %2720, %v2359
    %v2722 = vpop.permute.xlu0 %2721
    %2723 = vset.pattern.permute.xlu0 0
    %2724 = vperm.xlu0 %2723, %v2360
    %v2725 = vpop.permute.xlu0 %2724
    %2726 = vset.pattern.permute.xlu0 0
    %2727 = vperm.xlu0 %2726, %v2361
    %v2728 = vpop.permute.xlu0 %2727
    %2729 = vset.pattern.permute.xlu0 0
    %2730 = vperm.xlu0 %2729, %v2362
    %v2731 = vpop.permute.xlu0 %2730
    %2732 = vset.pattern.permute.xlu0 0
    %2733 = vperm.xlu0 %2732, %v2363
    %v2734 = vpop.permute.xlu0 %2733
    %2735 = vset.pattern.permute.xlu0 0
    %2736 = vperm.xlu0 %2735, %v2364
    %v2737 = vpop.permute.xlu0 %2736
    %2738 = vset.pattern.permute.xlu0 0
    %2739 = vperm.xlu0 %2738, %v2365
    %v2740 = vpop.permute.xlu0 %2739
    %2741 = vset.pattern.permute.xlu0 0
    %2742 = vperm.xlu0 %2741, %v2366
    %v2743 = vpop.permute.xlu0 %2742
    %2744 = vset.pattern.permute.xlu0 0
    %2745 = vperm.xlu0 %2744, %v2367
    %v2746 = vpop.permute.xlu0 %2745
    %2747 = vset.pattern.permute.xlu0 0
    %2748 = vperm.xlu0 %2747, %v2368
    %v2749 = vpop.permute.xlu0 %2748
    %2750 = vset.pattern.permute.xlu0 0
    %2751 = vperm.xlu0 %2750, %v2369
    %v2752 = vpop.permute.xlu0 %2751
    %2753 = vset.pattern.permute.xlu0 0
    %2754 = vperm.xlu0 %2753, %v2370
    %v2755 = vpop.permute.xlu0 %2754
    %2756 = vset.pattern.permute.xlu0 0
    %2757 = vperm.xlu0 %2756, %v2371
    %v2758 = vpop.permute.xlu0 %2757
    %2759 = vset.pattern.permute.xlu0 0
    %2760 = vperm.xlu0 %2759, %v2372
    %v2761 = vpop.permute.xlu0 %2760
    %2762 = vset.pattern.permute.xlu0 0
    %2763 = vperm.xlu0 %2762, %v2373
    %v2764 = vpop.permute.xlu0 %2763
    %2765 = vset.pattern.permute.xlu0 0
    %2766 = vperm.xlu0 %2765, %v2374
    %v2767 = vpop.permute.xlu0 %2766
    %2768 = vset.pattern.permute.xlu0 0
    %2769 = vperm.xlu0 %2768, %v2375
    %v2770 = vpop.permute.xlu0 %2769
    %2771 = vset.pattern.permute.xlu0 0
    %2772 = vperm.xlu0 %2771, %v2376
    %v2773 = vpop.permute.xlu0 %2772
    %2774 = vset.pattern.permute.xlu0 0
    %2775 = vperm.xlu0 %2774, %v2377
    %v2776 = vpop.permute.xlu0 %2775
    %2777 = vset.pattern.permute.xlu0 0
    %2778 = vperm.xlu0 %2777, %v2378
    %v2779 = vpop.permute.xlu0 %2778
    %2780 = vset.pattern.permute.xlu0 0
    %2781 = vperm.xlu0 %2780, %v2379
    %v2782 = vpop.permute.xlu0 %2781
    %2783 = vset.pattern.permute.xlu0 0
    %2784 = vperm.xlu0 %2783, %v2380
    %v2785 = vpop.permute.xlu0 %2784
    %2786 = vset.pattern.permute.xlu0 0
    %2787 = vperm.xlu0 %2786, %v2381
    %v2788 = vpop.permute.xlu0 %2787
    %2789 = vset.pattern.permute.xlu0 0
    %2790 = vperm.xlu0 %2789, %v2382
    %v2791 = vpop.permute.xlu0 %2790
    %2792 = vset.pattern.permute.xlu0 0
    %2793 = vperm.xlu0 %2792, %v2383
    %v2794 = vpop.permute.xlu0 %2793
    %2795 = vset.pattern.permute.xlu0 0
    %2796 = vperm.xlu0 %2795, %v2384
    %v2797 = vpop.permute.xlu0 %2796
    %2798 = vset.pattern.permute.xlu0 0
    %2799 = vperm.xlu0 %2798, %v2385
    %v2800 = vpop.permute.xlu0 %2799
    %2801 = vset.pattern.permute.xlu0 0
    %2802 = vperm.xlu0 %2801, %v2386
    %v2803 = vpop.permute.xlu0 %2802
    %2804 = vset.pattern.permute.xlu0 0
    %2805 = vperm.xlu0 %2804, %v2387
    %v2806 = vpop.permute.xlu0 %2805
    %2807 = vset.pattern.permute.xlu0 0
    %2808 = vperm.xlu0 %2807, %v2388
    %v2809 = vpop.permute.xlu0 %2808
    %2810 = vset.pattern.permute.xlu0 0
    %2811 = vperm.xlu0 %2810, %v2389
    %v2812 = vpop.permute.xlu0 %2811
    %2813 = vset.pattern.permute.xlu0 0
    %2814 = vperm.xlu0 %2813, %v2390
    %v2815 = vpop.permute.xlu0 %2814
    %2816 = vset.pattern.permute.xlu0 0
    %2817 = vperm.xlu0 %2816, %v2391
    %v2818 = vpop.permute.xlu0 %2817
    %2819 = vset.pattern.permute.xlu0 0
    %2820 = vperm.xlu0 %2819, %v2392
    %v2821 = vpop.permute.xlu0 %2820
    %2822 = vset.pattern.permute.xlu0 0
    %2823 = vperm.xlu0 %2822, %v2393
    %v2824 = vpop.permute.xlu0 %2823
    %2825 = vset.pattern.permute.xlu0 0
    %2826 = vperm.xlu0 %2825, %v2394
    %v2827 = vpop.permute.xlu0 %2826
    %2828 = vset.pattern.permute.xlu0 0
    %2829 = vperm.xlu0 %2828, %v2395
    %v2830 = vpop.permute.xlu0 %2829
    %2831 = vset.pattern.permute.xlu0 0
    %2832 = vperm.xlu0 %2831, %v2396
    %v2833 = vpop.permute.xlu0 %2832
    %2834 = vset.pattern.permute.xlu0 0
    %2835 = vperm.xlu0 %2834, %v2397
    %v2836 = vpop.permute.xlu0 %2835
    %2837 = vset.pattern.permute.xlu0 0
    %2838 = vperm.xlu0 %2837, %v2398
    %v2839 = vpop.permute.xlu0 %2838
    %2840 = vset.pattern.permute.xlu0 0
    %2841 = vperm.xlu0 %2840, %v2399
    %v2842 = vpop.permute.xlu0 %2841
    %2843 = vset.pattern.permute.xlu0 0
    %2844 = vperm.xlu0 %2843, %v2400
    %v2845 = vpop.permute.xlu0 %2844
    %2846 = vset.pattern.permute.xlu0 0
    %2847 = vperm.xlu0 %2846, %v2401
    %v2848 = vpop.permute.xlu0 %2847
    %2849 = vset.pattern.permute.xlu0 0
    %2850 = vperm.xlu0 %2849, %v2402
    %v2851 = vpop.permute.xlu0 %2850
    %2852 = vset.pattern.permute.xlu0 0
    %2853 = vperm.xlu0 %2852, %v2403
    %v2854 = vpop.permute.xlu0 %2853
    %2855 = vset.pattern.permute.xlu0 0
    %2856 = vperm.xlu0 %2855, %v2404
    %v2857 = vpop.permute.xlu0 %2856
    %2858 = vset.pattern.permute.xlu0 0
    %2859 = vperm.xlu0 %2858, %v2405
    %v2860 = vpop.permute.xlu0 %2859
    %2861 = vset.pattern.permute.xlu0 0
    %2862 = vperm.xlu0 %2861, %v2406
    %v2863 = vpop.permute.xlu0 %2862
    %2864 = vset.pattern.permute.xlu0 0
    %2865 = vperm.xlu0 %2864, %v2407
    %v2866 = vpop.permute.xlu0 %2865
    %2867 = vset.pattern.permute.xlu0 0
    %2868 = vperm.xlu0 %2867, %v2408
    %v2869 = vpop.permute.xlu0 %2868
    %2870 = vset.pattern.permute.xlu0 0
    %2871 = vperm.xlu0 %2870, %v2409
    %v2872 = vpop.permute.xlu0 %2871
    %2873 = vset.pattern.permute.xlu0 0
    %2874 = vperm.xlu0 %2873, %v2410
    %v2875 = vpop.permute.xlu0 %2874
    %2876 = vset.pattern.permute.xlu0 0
    %2877 = vperm.xlu0 %2876, %v2411
    %v2878 = vpop.permute.xlu0 %2877
    %2879 = vset.pattern.permute.xlu0 0
    %2880 = vperm.xlu0 %2879, %v2412
    %v2881 = vpop.permute.xlu0 %2880
    %2882 = vset.pattern.permute.xlu0 0
    %2883 = vperm.xlu0 %2882, %v2413
    %v2884 = vpop.permute.xlu0 %2883
    %2885 = vset.pattern.permute.xlu0 0
    %2886 = vperm.xlu0 %2885, %v2414
    %v2887 = vpop.permute.xlu0 %2886
    %2888 = vset.pattern.permute.xlu0 0
    %2889 = vperm.xlu0 %2888, %v2415
    %v2890 = vpop.permute.xlu0 %2889
    %2891 = vset.pattern.permute.xlu0 0
    %2892 = vperm.xlu0 %2891, %v2416
    %v2893 = vpop.permute.xlu0 %2892
    %2894 = vset.pattern.permute.xlu0 0
    %2895 = vperm.xlu0 %2894, %v2417
    %v2896 = vpop.permute.xlu0 %2895
    %2897 = vset.pattern.permute.xlu0 0
    %2898 = vperm.xlu0 %2897, %v2418
    %v2899 = vpop.permute.xlu0 %2898
    %2900 = vset.pattern.permute.xlu0 0
    %2901 = vperm.xlu0 %2900, %v2419
    %v2902 = vpop.permute.xlu0 %2901
    %2903 = vset.pattern.permute.xlu0 0
    %2904 = vperm.xlu0 %2903, %v2420
    %v2905 = vpop.permute.xlu0 %2904
    %2906 = vset.pattern.permute.xlu0 0
    %2907 = vperm.xlu0 %2906, %v2421
    %v2908 = vpop.permute.xlu0 %2907
    %2909 = vset.pattern.permute.xlu0 0
    %2910 = vperm.xlu0 %2909, %v2422
    %v2911 = vpop.permute.xlu0 %2910
    %2912 = vset.pattern.permute.xlu0 0
    %2913 = vperm.xlu0 %2912, %v2423
    %v2914 = vpop.permute.xlu0 %2913
    %2915 = vset.pattern.permute.xlu0 0
    %2916 = vperm.xlu0 %2915, %v2424
    %v2917 = vpop.permute.xlu0 %2916
    %2918 = vset.pattern.permute.xlu0 0
    %2919 = vperm.xlu0 %2918, %v2425
    %v2920 = vpop.permute.xlu0 %2919
    %2921 = vset.pattern.permute.xlu0 0
    %2922 = vperm.xlu0 %2921, %v2426
    %v2923 = vpop.permute.xlu0 %2922
    %2924 = vset.pattern.permute.xlu0 0
    %2925 = vperm.xlu0 %2924, %v2427
    %v2926 = vpop.permute.xlu0 %2925
    %2927 = vset.pattern.permute.xlu0 0
    %2928 = vperm.xlu0 %2927, %v2428
    %v2929 = vpop.permute.xlu0 %2928
    %2930 = vset.pattern.permute.xlu0 0
    %2931 = vperm.xlu0 %2930, %v2429
    %v2932 = vpop.permute.xlu0 %2931
    %2933 = vset.pattern.permute.xlu0 0
    %2934 = vperm.xlu0 %2933, %v2430
    %v2935 = vpop.permute.xlu0 %2934
    %2936 = vset.pattern.permute.xlu0 0
    %2937 = vperm.xlu0 %2936, %v2431
    %v2938 = vpop.permute.xlu0 %2937
    %2939 = vset.pattern.permute.xlu0 0
    %2940 = vperm.xlu0 %2939, %v2432
    %v2941 = vpop.permute.xlu0 %2940
    %2942 = vset.pattern.permute.xlu0 0
    %2943 = vperm.xlu0 %2942, %v2433
    %v2944 = vpop.permute.xlu0 %2943
    %2945 = vset.pattern.permute.xlu0 0
    %2946 = vperm.xlu0 %2945, %v2434
    %v2947 = vpop.permute.xlu0 %2946
    %v2948 = vlaneseq
    %v2949 = vshrl.u32 %v2948, 7
    %v2950 = vsub.s32 %v2095, %v2949
    %v2951 = vrot.slane %v2566, %v2950
    %v2952 = vadd.s32 %v2095, 4294967288
    %v2953 = vlaneseq
    %v2954 = vshrl.u32 %v2953, 7
    %v2955 = vsub.s32 %v2952, %v2954
    %v2956 = vrot.slane %v2569, %v2955
    %vm2957 = vcmask 130112
    %v2958 = vsel %vm2957, %v2956, %v2951
    %v2959 = vadd.s32 %v2095, 4294967280
    %v2960 = vlaneseq
    %v2961 = vshrl.u32 %v2960, 7
    %v2962 = vsub.s32 %v2959, %v2961
    %v2963 = vrot.slane %v2572, %v2962
    %vm2964 = vcmask 195712
    %v2965 = vsel %vm2964, %v2963, %v2958
    %v2966 = vadd.s32 %v2095, 4294967272
    %v2967 = vlaneseq
    %v2968 = vshrl.u32 %v2967, 7
    %v2969 = vsub.s32 %v2966, %v2968
    %v2970 = vrot.slane %v2575, %v2969
    %vm2971 = vcmask 261312
    %v2972 = vsel %vm2971, %v2970, %v2965
    %v2973 = vadd.s32 %v2095, 4294967264
    %v2974 = vlaneseq
    %v2975 = vshrl.u32 %v2974, 7
    %v2976 = vsub.s32 %v2973, %v2975
    %v2977 = vrot.slane %v2578, %v2976
    %vm2978 = vcmask 326912
    %v2979 = vsel %vm2978, %v2977, %v2972
    %v2980 = vadd.s32 %v2095, 4294967256
    %v2981 = vlaneseq
    %v2982 = vshrl.u32 %v2981, 7
    %v2983 = vsub.s32 %v2980, %v2982
    %v2984 = vrot.slane %v2581, %v2983
    %vm2985 = vcmask 392512
    %v2986 = vsel %vm2985, %v2984, %v2979
    %v2987 = vadd.s32 %v2095, 4294967248
    %v2988 = vlaneseq
    %v2989 = vshrl.u32 %v2988, 7
    %v2990 = vsub.s32 %v2987, %v2989
    %v2991 = vrot.slane %v2584, %v2990
    %vm2992 = vcmask 458112
    %v2993 = vsel %vm2992, %v2991, %v2986
    %v2994 = vadd.s32 %v2095, 4294967240
    %v2995 = vlaneseq
    %v2996 = vshrl.u32 %v2995, 7
    %v2997 = vsub.s32 %v2994, %v2996
    %v2998 = vrot.slane %v2587, %v2997
    %vm2999 = vcmask 523712
    %v3000 = vsel %vm2999, %v2998, %v2993
    %v3001 = vadd.s32 %v2095, 4294967232
    %v3002 = vlaneseq
    %v3003 = vshrl.u32 %v3002, 7
    %v3004 = vsub.s32 %v3001, %v3003
    %v3005 = vrot.slane %v2590, %v3004
    %vm3006 = vcmask 589312
    %v3007 = vsel %vm3006, %v3005, %v3000
    %v3008 = vadd.s32 %v2095, 4294967224
    %v3009 = vlaneseq
    %v3010 = vshrl.u32 %v3009, 7
    %v3011 = vsub.s32 %v3008, %v3010
    %v3012 = vrot.slane %v2593, %v3011
    %vm3013 = vcmask 654912
    %v3014 = vsel %vm3013, %v3012, %v3007
    %v3015 = vadd.s32 %v2095, 4294967216
    %v3016 = vlaneseq
    %v3017 = vshrl.u32 %v3016, 7
    %v3018 = vsub.s32 %v3015, %v3017
    %v3019 = vrot.slane %v2596, %v3018
    %vm3020 = vcmask 720512
    %v3021 = vsel %vm3020, %v3019, %v3014
    %v3022 = vadd.s32 %v2095, 4294967208
    %v3023 = vlaneseq
    %v3024 = vshrl.u32 %v3023, 7
    %v3025 = vsub.s32 %v3022, %v3024
    %v3026 = vrot.slane %v2599, %v3025
    %vm3027 = vcmask 786112
    %v3028 = vsel %vm3027, %v3026, %v3021
    %v3029 = vadd.s32 %v2095, 4294967200
    %v3030 = vlaneseq
    %v3031 = vshrl.u32 %v3030, 7
    %v3032 = vsub.s32 %v3029, %v3031
    %v3033 = vrot.slane %v2602, %v3032
    %vm3034 = vcmask 851712
    %v3035 = vsel %vm3034, %v3033, %v3028
    %v3036 = vadd.s32 %v2095, 4294967192
    %v3037 = vlaneseq
    %v3038 = vshrl.u32 %v3037, 7
    %v3039 = vsub.s32 %v3036, %v3038
    %v3040 = vrot.slane %v2605, %v3039
    %vm3041 = vcmask 917312
    %v3042 = vsel %vm3041, %v3040, %v3035
    %v3043 = vadd.s32 %v2095, 4294967184
    %v3044 = vlaneseq
    %v3045 = vshrl.u32 %v3044, 7
    %v3046 = vsub.s32 %v3043, %v3045
    %v3047 = vrot.slane %v2608, %v3046
    %vm3048 = vcmask 982912
    %v3049 = vsel %vm3048, %v3047, %v3042
    %v3050 = vadd.s32 %v2095, 4294967176
    %v3051 = vlaneseq
    %v3052 = vshrl.u32 %v3051, 7
    %v3053 = vsub.s32 %v3050, %v3052
    %v3054 = vrot.slane %v2611, %v3053
    %vm3055 = vcmask 1048512
    %v3056 = vsel %vm3055, %v3054, %v3049
    %v3057 = vlaneseq
    %v3058 = vshrl.u32 %v3057, 7
    %v3059 = vsub.s32 %v2095, %v3058
    %v3060 = vrot.slane %v2614, %v3059
    %v3061 = vlaneseq
    %v3062 = vshrl.u32 %v3061, 7
    %v3063 = vsub.s32 %v2952, %v3062
    %v3064 = vrot.slane %v2617, %v3063
    %v3065 = vsel %vm2957, %v3064, %v3060
    %v3066 = vlaneseq
    %v3067 = vshrl.u32 %v3066, 7
    %v3068 = vsub.s32 %v2959, %v3067
    %v3069 = vrot.slane %v2620, %v3068
    %v3070 = vsel %vm2964, %v3069, %v3065
    %v3071 = vlaneseq
    %v3072 = vshrl.u32 %v3071, 7
    %v3073 = vsub.s32 %v2966, %v3072
    %v3074 = vrot.slane %v2623, %v3073
    %v3075 = vsel %vm2971, %v3074, %v3070
    %v3076 = vlaneseq
    %v3077 = vshrl.u32 %v3076, 7
    %v3078 = vsub.s32 %v2973, %v3077
    %v3079 = vrot.slane %v2626, %v3078
    %v3080 = vsel %vm2978, %v3079, %v3075
    %v3081 = vlaneseq
    %v3082 = vshrl.u32 %v3081, 7
    %v3083 = vsub.s32 %v2980, %v3082
    %v3084 = vrot.slane %v2629, %v3083
    %v3085 = vsel %vm2985, %v3084, %v3080
    %v3086 = vlaneseq
    %v3087 = vshrl.u32 %v3086, 7
    %v3088 = vsub.s32 %v2987, %v3087
    %v3089 = vrot.slane %v2632, %v3088
    %v3090 = vsel %vm2992, %v3089, %v3085
    %v3091 = vlaneseq
    %v3092 = vshrl.u32 %v3091, 7
    %v3093 = vsub.s32 %v2994, %v3092
    %v3094 = vrot.slane %v2635, %v3093
    %v3095 = vsel %vm2999, %v3094, %v3090
    %v3096 = vlaneseq
    %v3097 = vshrl.u32 %v3096, 7
    %v3098 = vsub.s32 %v3001, %v3097
    %v3099 = vrot.slane %v2638, %v3098
    %v3100 = vsel %vm3006, %v3099, %v3095
    %v3101 = vlaneseq
    %v3102 = vshrl.u32 %v3101, 7
    %v3103 = vsub.s32 %v3008, %v3102
    %v3104 = vrot.slane %v2641, %v3103
    %v3105 = vsel %vm3013, %v3104, %v3100
    %v3106 = vlaneseq
    %v3107 = vshrl.u32 %v3106, 7
    %v3108 = vsub.s32 %v3015, %v3107
    %v3109 = vrot.slane %v2644, %v3108
    %v3110 = vsel %vm3020, %v3109, %v3105
    %v3111 = vlaneseq
    %v3112 = vshrl.u32 %v3111, 7
    %v3113 = vsub.s32 %v3022, %v3112
    %v3114 = vrot.slane %v2647, %v3113
    %v3115 = vsel %vm3027, %v3114, %v3110
    %v3116 = vlaneseq
    %v3117 = vshrl.u32 %v3116, 7
    %v3118 = vsub.s32 %v3029, %v3117
    %v3119 = vrot.slane %v2650, %v3118
    %v3120 = vsel %vm3034, %v3119, %v3115
    %v3121 = vlaneseq
    %v3122 = vshrl.u32 %v3121, 7
    %v3123 = vsub.s32 %v3036, %v3122
    %v3124 = vrot.slane %v2653, %v3123
    %v3125 = vsel %vm3041, %v3124, %v3120
    %v3126 = vlaneseq
    %v3127 = vshrl.u32 %v3126, 7
    %v3128 = vsub.s32 %v3043, %v3127
    %v3129 = vrot.slane %v2656, %v3128
    %v3130 = vsel %vm3048, %v3129, %v3125
    %v3131 = vlaneseq
    %v3132 = vshrl.u32 %v3131, 7
    %v3133 = vsub.s32 %v3050, %v3132
    %v3134 = vrot.slane %v2659, %v3133
    %v3135 = vsel %vm3055, %v3134, %v3130
    %v3136 = vlaneseq
    %v3137 = vshrl.u32 %v3136, 7
    %v3138 = vsub.s32 %v2095, %v3137
    %v3139 = vrot.slane %v2662, %v3138
    %v3140 = vlaneseq
    %v3141 = vshrl.u32 %v3140, 7
    %v3142 = vsub.s32 %v2952, %v3141
    %v3143 = vrot.slane %v2665, %v3142
    %v3144 = vsel %vm2957, %v3143, %v3139
    %v3145 = vlaneseq
    %v3146 = vshrl.u32 %v3145, 7
    %v3147 = vsub.s32 %v2959, %v3146
    %v3148 = vrot.slane %v2668, %v3147
    %v3149 = vsel %vm2964, %v3148, %v3144
    %v3150 = vlaneseq
    %v3151 = vshrl.u32 %v3150, 7
    %v3152 = vsub.s32 %v2966, %v3151
    %v3153 = vrot.slane %v2671, %v3152
    %v3154 = vsel %vm2971, %v3153, %v3149
    %v3155 = vlaneseq
    %v3156 = vshrl.u32 %v3155, 7
    %v3157 = vsub.s32 %v2973, %v3156
    %v3158 = vrot.slane %v2674, %v3157
    %v3159 = vsel %vm2978, %v3158, %v3154
    %v3160 = vlaneseq
    %v3161 = vshrl.u32 %v3160, 7
    %v3162 = vsub.s32 %v2980, %v3161
    %v3163 = vrot.slane %v2677, %v3162
    %v3164 = vsel %vm2985, %v3163, %v3159
    %v3165 = vlaneseq
    %v3166 = vshrl.u32 %v3165, 7
    %v3167 = vsub.s32 %v2987, %v3166
    %v3168 = vrot.slane %v2680, %v3167
    %v3169 = vsel %vm2992, %v3168, %v3164
    %v3170 = vlaneseq
    %v3171 = vshrl.u32 %v3170, 7
    %v3172 = vsub.s32 %v2994, %v3171
    %v3173 = vrot.slane %v2683, %v3172
    %v3174 = vsel %vm2999, %v3173, %v3169
    %v3175 = vlaneseq
    %v3176 = vshrl.u32 %v3175, 7
    %v3177 = vsub.s32 %v3001, %v3176
    %v3178 = vrot.slane %v2686, %v3177
    %v3179 = vsel %vm3006, %v3178, %v3174
    %v3180 = vlaneseq
    %v3181 = vshrl.u32 %v3180, 7
    %v3182 = vsub.s32 %v3008, %v3181
    %v3183 = vrot.slane %v2689, %v3182
    %v3184 = vsel %vm3013, %v3183, %v3179
    %v3185 = vlaneseq
    %v3186 = vshrl.u32 %v3185, 7
    %v3187 = vsub.s32 %v3015, %v3186
    %v3188 = vrot.slane %v2692, %v3187
    %v3189 = vsel %vm3020, %v3188, %v3184
    %v3190 = vlaneseq
    %v3191 = vshrl.u32 %v3190, 7
    %v3192 = vsub.s32 %v3022, %v3191
    %v3193 = vrot.slane %v2695, %v3192
    %v3194 = vsel %vm3027, %v3193, %v3189
    %v3195 = vlaneseq
    %v3196 = vshrl.u32 %v3195, 7
    %v3197 = vsub.s32 %v3029, %v3196
    %v3198 = vrot.slane %v2698, %v3197
    %v3199 = vsel %vm3034, %v3198, %v3194
    %v3200 = vlaneseq
    %v3201 = vshrl.u32 %v3200, 7
    %v3202 = vsub.s32 %v3036, %v3201
    %v3203 = vrot.slane %v2701, %v3202
    %v3204 = vsel %vm3041, %v3203, %v3199
    %v3205 = vlaneseq
    %v3206 = vshrl.u32 %v3205, 7
    %v3207 = vsub.s32 %v3043, %v3206
    %v3208 = vrot.slane %v2704, %v3207
    %v3209 = vsel %vm3048, %v3208, %v3204
    %v3210 = vlaneseq
    %v3211 = vshrl.u32 %v3210, 7
    %v3212 = vsub.s32 %v3050, %v3211
    %v3213 = vrot.slane %v2707, %v3212
    %v3214 = vsel %vm3055, %v3213, %v3209
    %v3215 = vlaneseq
    %v3216 = vshrl.u32 %v3215, 7
    %v3217 = vsub.s32 %v2095, %v3216
    %v3218 = vrot.slane %v2710, %v3217
    %v3219 = vlaneseq
    %v3220 = vshrl.u32 %v3219, 7
    %v3221 = vsub.s32 %v2952, %v3220
    %v3222 = vrot.slane %v2713, %v3221
    %v3223 = vsel %vm2957, %v3222, %v3218
    %v3224 = vlaneseq
    %v3225 = vshrl.u32 %v3224, 7
    %v3226 = vsub.s32 %v2959, %v3225
    %v3227 = vrot.slane %v2716, %v3226
    %v3228 = vsel %vm2964, %v3227, %v3223
    %v3229 = vlaneseq
    %v3230 = vshrl.u32 %v3229, 7
    %v3231 = vsub.s32 %v2966, %v3230
    %v3232 = vrot.slane %v2719, %v3231
    %v3233 = vsel %vm2971, %v3232, %v3228
    %v3234 = vlaneseq
    %v3235 = vshrl.u32 %v3234, 7
    %v3236 = vsub.s32 %v2973, %v3235
    %v3237 = vrot.slane %v2722, %v3236
    %v3238 = vsel %vm2978, %v3237, %v3233
    %v3239 = vlaneseq
    %v3240 = vshrl.u32 %v3239, 7
    %v3241 = vsub.s32 %v2980, %v3240
    %v3242 = vrot.slane %v2725, %v3241
    %v3243 = vsel %vm2985, %v3242, %v3238
    %v3244 = vlaneseq
    %v3245 = vshrl.u32 %v3244, 7
    %v3246 = vsub.s32 %v2987, %v3245
    %v3247 = vrot.slane %v2728, %v3246
    %v3248 = vsel %vm2992, %v3247, %v3243
    %v3249 = vlaneseq
    %v3250 = vshrl.u32 %v3249, 7
    %v3251 = vsub.s32 %v2994, %v3250
    %v3252 = vrot.slane %v2731, %v3251
    %v3253 = vsel %vm2999, %v3252, %v3248
    %v3254 = vlaneseq
    %v3255 = vshrl.u32 %v3254, 7
    %v3256 = vsub.s32 %v3001, %v3255
    %v3257 = vrot.slane %v2734, %v3256
    %v3258 = vsel %vm3006, %v3257, %v3253
    %v3259 = vlaneseq
    %v3260 = vshrl.u32 %v3259, 7
    %v3261 = vsub.s32 %v3008, %v3260
    %v3262 = vrot.slane %v2737, %v3261
    %v3263 = vsel %vm3013, %v3262, %v3258
    %v3264 = vlaneseq
    %v3265 = vshrl.u32 %v3264, 7
    %v3266 = vsub.s32 %v3015, %v3265
    %v3267 = vrot.slane %v2740, %v3266
    %v3268 = vsel %vm3020, %v3267, %v3263
    %v3269 = vlaneseq
    %v3270 = vshrl.u32 %v3269, 7
    %v3271 = vsub.s32 %v3022, %v3270
    %v3272 = vrot.slane %v2743, %v3271
    %v3273 = vsel %vm3027, %v3272, %v3268
    %v3274 = vlaneseq
    %v3275 = vshrl.u32 %v3274, 7
    %v3276 = vsub.s32 %v3029, %v3275
    %v3277 = vrot.slane %v2746, %v3276
    %v3278 = vsel %vm3034, %v3277, %v3273
    %v3279 = vlaneseq
    %v3280 = vshrl.u32 %v3279, 7
    %v3281 = vsub.s32 %v3036, %v3280
    %v3282 = vrot.slane %v2749, %v3281
    %v3283 = vsel %vm3041, %v3282, %v3278
    %v3284 = vlaneseq
    %v3285 = vshrl.u32 %v3284, 7
    %v3286 = vsub.s32 %v3043, %v3285
    %v3287 = vrot.slane %v2752, %v3286
    %v3288 = vsel %vm3048, %v3287, %v3283
    %v3289 = vlaneseq
    %v3290 = vshrl.u32 %v3289, 7
    %v3291 = vsub.s32 %v3050, %v3290
    %v3292 = vrot.slane %v2755, %v3291
    %v3293 = vsel %vm3055, %v3292, %v3288
    %v3294 = vlaneseq
    %v3295 = vshrl.u32 %v3294, 7
    %v3296 = vsub.s32 %v2095, %v3295
    %v3297 = vrot.slane %v2758, %v3296
    %v3298 = vlaneseq
    %v3299 = vshrl.u32 %v3298, 7
    %v3300 = vsub.s32 %v2952, %v3299
    %v3301 = vrot.slane %v2761, %v3300
    %v3302 = vsel %vm2957, %v3301, %v3297
    %v3303 = vlaneseq
    %v3304 = vshrl.u32 %v3303, 7
    %v3305 = vsub.s32 %v2959, %v3304
    %v3306 = vrot.slane %v2764, %v3305
    %v3307 = vsel %vm2964, %v3306, %v3302
    %v3308 = vlaneseq
    %v3309 = vshrl.u32 %v3308, 7
    %v3310 = vsub.s32 %v2966, %v3309
    %v3311 = vrot.slane %v2767, %v3310
    %v3312 = vsel %vm2971, %v3311, %v3307
    %v3313 = vlaneseq
    %v3314 = vshrl.u32 %v3313, 7
    %v3315 = vsub.s32 %v2973, %v3314
    %v3316 = vrot.slane %v2770, %v3315
    %v3317 = vsel %vm2978, %v3316, %v3312
    %v3318 = vlaneseq
    %v3319 = vshrl.u32 %v3318, 7
    %v3320 = vsub.s32 %v2980, %v3319
    %v3321 = vrot.slane %v2773, %v3320
    %v3322 = vsel %vm2985, %v3321, %v3317
    %v3323 = vlaneseq
    %v3324 = vshrl.u32 %v3323, 7
    %v3325 = vsub.s32 %v2987, %v3324
    %v3326 = vrot.slane %v2776, %v3325
    %v3327 = vsel %vm2992, %v3326, %v3322
    %v3328 = vlaneseq
    %v3329 = vshrl.u32 %v3328, 7
    %v3330 = vsub.s32 %v2994, %v3329
    %v3331 = vrot.slane %v2779, %v3330
    %v3332 = vsel %vm2999, %v3331, %v3327
    %v3333 = vlaneseq
    %v3334 = vshrl.u32 %v3333, 7
    %v3335 = vsub.s32 %v3001, %v3334
    %v3336 = vrot.slane %v2782, %v3335
    %v3337 = vsel %vm3006, %v3336, %v3332
    %v3338 = vlaneseq
    %v3339 = vshrl.u32 %v3338, 7
    %v3340 = vsub.s32 %v3008, %v3339
    %v3341 = vrot.slane %v2785, %v3340
    %v3342 = vsel %vm3013, %v3341, %v3337
    %v3343 = vlaneseq
    %v3344 = vshrl.u32 %v3343, 7
    %v3345 = vsub.s32 %v3015, %v3344
    %v3346 = vrot.slane %v2788, %v3345
    %v3347 = vsel %vm3020, %v3346, %v3342
    %v3348 = vlaneseq
    %v3349 = vshrl.u32 %v3348, 7
    %v3350 = vsub.s32 %v3022, %v3349
    %v3351 = vrot.slane %v2791, %v3350
    %v3352 = vsel %vm3027, %v3351, %v3347
    %v3353 = vlaneseq
    %v3354 = vshrl.u32 %v3353, 7
    %v3355 = vsub.s32 %v3029, %v3354
    %v3356 = vrot.slane %v2794, %v3355
    %v3357 = vsel %vm3034, %v3356, %v3352
    %v3358 = vlaneseq
    %v3359 = vshrl.u32 %v3358, 7
    %v3360 = vsub.s32 %v3036, %v3359
    %v3361 = vrot.slane %v2797, %v3360
    %v3362 = vsel %vm3041, %v3361, %v3357
    %v3363 = vlaneseq
    %v3364 = vshrl.u32 %v3363, 7
    %v3365 = vsub.s32 %v3043, %v3364
    %v3366 = vrot.slane %v2800, %v3365
    %v3367 = vsel %vm3048, %v3366, %v3362
    %v3368 = vlaneseq
    %v3369 = vshrl.u32 %v3368, 7
    %v3370 = vsub.s32 %v3050, %v3369
    %v3371 = vrot.slane %v2803, %v3370
    %v3372 = vsel %vm3055, %v3371, %v3367
    %v3373 = vlaneseq
    %v3374 = vshrl.u32 %v3373, 7
    %v3375 = vsub.s32 %v2095, %v3374
    %v3376 = vrot.slane %v2806, %v3375
    %v3377 = vlaneseq
    %v3378 = vshrl.u32 %v3377, 7
    %v3379 = vsub.s32 %v2952, %v3378
    %v3380 = vrot.slane %v2809, %v3379
    %v3381 = vsel %vm2957, %v3380, %v3376
    %v3382 = vlaneseq
    %v3383 = vshrl.u32 %v3382, 7
    %v3384 = vsub.s32 %v2959, %v3383
    %v3385 = vrot.slane %v2812, %v3384
    %v3386 = vsel %vm2964, %v3385, %v3381
    %v3387 = vlaneseq
    %v3388 = vshrl.u32 %v3387, 7
    %v3389 = vsub.s32 %v2966, %v3388
    %v3390 = vrot.slane %v2815, %v3389
    %v3391 = vsel %vm2971, %v3390, %v3386
    %v3392 = vlaneseq
    %v3393 = vshrl.u32 %v3392, 7
    %v3394 = vsub.s32 %v2973, %v3393
    %v3395 = vrot.slane %v2818, %v3394
    %v3396 = vsel %vm2978, %v3395, %v3391
    %v3397 = vlaneseq
    %v3398 = vshrl.u32 %v3397, 7
    %v3399 = vsub.s32 %v2980, %v3398
    %v3400 = vrot.slane %v2821, %v3399
    %v3401 = vsel %vm2985, %v3400, %v3396
    %v3402 = vlaneseq
    %v3403 = vshrl.u32 %v3402, 7
    %v3404 = vsub.s32 %v2987, %v3403
    %v3405 = vrot.slane %v2824, %v3404
    %v3406 = vsel %vm2992, %v3405, %v3401
    %v3407 = vlaneseq
    %v3408 = vshrl.u32 %v3407, 7
    %v3409 = vsub.s32 %v2994, %v3408
    %v3410 = vrot.slane %v2827, %v3409
    %v3411 = vsel %vm2999, %v3410, %v3406
    %v3412 = vlaneseq
    %v3413 = vshrl.u32 %v3412, 7
    %v3414 = vsub.s32 %v3001, %v3413
    %v3415 = vrot.slane %v2830, %v3414
    %v3416 = vsel %vm3006, %v3415, %v3411
    %v3417 = vlaneseq
    %v3418 = vshrl.u32 %v3417, 7
    %v3419 = vsub.s32 %v3008, %v3418
    %v3420 = vrot.slane %v2833, %v3419
    %v3421 = vsel %vm3013, %v3420, %v3416
    %v3422 = vlaneseq
    %v3423 = vshrl.u32 %v3422, 7
    %v3424 = vsub.s32 %v3015, %v3423
    %v3425 = vrot.slane %v2836, %v3424
    %v3426 = vsel %vm3020, %v3425, %v3421
    %v3427 = vlaneseq
    %v3428 = vshrl.u32 %v3427, 7
    %v3429 = vsub.s32 %v3022, %v3428
    %v3430 = vrot.slane %v2839, %v3429
    %v3431 = vsel %vm3027, %v3430, %v3426
    %v3432 = vlaneseq
    %v3433 = vshrl.u32 %v3432, 7
    %v3434 = vsub.s32 %v3029, %v3433
    %v3435 = vrot.slane %v2842, %v3434
    %v3436 = vsel %vm3034, %v3435, %v3431
    %v3437 = vlaneseq
    %v3438 = vshrl.u32 %v3437, 7
    %v3439 = vsub.s32 %v3036, %v3438
    %v3440 = vrot.slane %v2845, %v3439
    %v3441 = vsel %vm3041, %v3440, %v3436
    %v3442 = vlaneseq
    %v3443 = vshrl.u32 %v3442, 7
    %v3444 = vsub.s32 %v3043, %v3443
    %v3445 = vrot.slane %v2848, %v3444
    %v3446 = vsel %vm3048, %v3445, %v3441
    %v3447 = vlaneseq
    %v3448 = vshrl.u32 %v3447, 7
    %v3449 = vsub.s32 %v3050, %v3448
    %v3450 = vrot.slane %v2851, %v3449
    %v3451 = vsel %vm3055, %v3450, %v3446
    %v3452 = vlaneseq
    %v3453 = vshrl.u32 %v3452, 7
    %v3454 = vsub.s32 %v2095, %v3453
    %v3455 = vrot.slane %v2854, %v3454
    %v3456 = vlaneseq
    %v3457 = vshrl.u32 %v3456, 7
    %v3458 = vsub.s32 %v2952, %v3457
    %v3459 = vrot.slane %v2857, %v3458
    %v3460 = vsel %vm2957, %v3459, %v3455
    %v3461 = vlaneseq
    %v3462 = vshrl.u32 %v3461, 7
    %v3463 = vsub.s32 %v2959, %v3462
    %v3464 = vrot.slane %v2860, %v3463
    %v3465 = vsel %vm2964, %v3464, %v3460
    %v3466 = vlaneseq
    %v3467 = vshrl.u32 %v3466, 7
    %v3468 = vsub.s32 %v2966, %v3467
    %v3469 = vrot.slane %v2863, %v3468
    %v3470 = vsel %vm2971, %v3469, %v3465
    %v3471 = vlaneseq
    %v3472 = vshrl.u32 %v3471, 7
    %v3473 = vsub.s32 %v2973, %v3472
    %v3474 = vrot.slane %v2866, %v3473
    %v3475 = vsel %vm2978, %v3474, %v3470
    %v3476 = vlaneseq
    %v3477 = vshrl.u32 %v3476, 7
    %v3478 = vsub.s32 %v2980, %v3477
    %v3479 = vrot.slane %v2869, %v3478
    %v3480 = vsel %vm2985, %v3479, %v3475
    %v3481 = vlaneseq
    %v3482 = vshrl.u32 %v3481, 7
    %v3483 = vsub.s32 %v2987, %v3482
    %v3484 = vrot.slane %v2872, %v3483
    %v3485 = vsel %vm2992, %v3484, %v3480
    %v3486 = vlaneseq
    %v3487 = vshrl.u32 %v3486, 7
    %v3488 = vsub.s32 %v2994, %v3487
    %v3489 = vrot.slane %v2875, %v3488
    %v3490 = vsel %vm2999, %v3489, %v3485
    %v3491 = vlaneseq
    %v3492 = vshrl.u32 %v3491, 7
    %v3493 = vsub.s32 %v3001, %v3492
    %v3494 = vrot.slane %v2878, %v3493
    %v3495 = vsel %vm3006, %v3494, %v3490
    %v3496 = vlaneseq
    %v3497 = vshrl.u32 %v3496, 7
    %v3498 = vsub.s32 %v3008, %v3497
    %v3499 = vrot.slane %v2881, %v3498
    %v3500 = vsel %vm3013, %v3499, %v3495
    %v3501 = vlaneseq
    %v3502 = vshrl.u32 %v3501, 7
    %v3503 = vsub.s32 %v3015, %v3502
    %v3504 = vrot.slane %v2884, %v3503
    %v3505 = vsel %vm3020, %v3504, %v3500
    %v3506 = vlaneseq
    %v3507 = vshrl.u32 %v3506, 7
    %v3508 = vsub.s32 %v3022, %v3507
    %v3509 = vrot.slane %v2887, %v3508
    %v3510 = vsel %vm3027, %v3509, %v3505
    %v3511 = vlaneseq
    %v3512 = vshrl.u32 %v3511, 7
    %v3513 = vsub.s32 %v3029, %v3512
    %v3514 = vrot.slane %v2890, %v3513
    %v3515 = vsel %vm3034, %v3514, %v3510
    %v3516 = vlaneseq
    %v3517 = vshrl.u32 %v3516, 7
    %v3518 = vsub.s32 %v3036, %v3517
    %v3519 = vrot.slane %v2893, %v3518
    %v3520 = vsel %vm3041, %v3519, %v3515
    %v3521 = vlaneseq
    %v3522 = vshrl.u32 %v3521, 7
    %v3523 = vsub.s32 %v3043, %v3522
    %v3524 = vrot.slane %v2896, %v3523
    %v3525 = vsel %vm3048, %v3524, %v3520
    %v3526 = vlaneseq
    %v3527 = vshrl.u32 %v3526, 7
    %v3528 = vsub.s32 %v3050, %v3527
    %v3529 = vrot.slane %v2899, %v3528
    %v3530 = vsel %vm3055, %v3529, %v3525
    %v3531 = vlaneseq
    %v3532 = vshrl.u32 %v3531, 7
    %v3533 = vsub.s32 %v2095, %v3532
    %v3534 = vrot.slane %v2902, %v3533
    %v3535 = vlaneseq
    %v3536 = vshrl.u32 %v3535, 7
    %v3537 = vsub.s32 %v2952, %v3536
    %v3538 = vrot.slane %v2905, %v3537
    %v3539 = vsel %vm2957, %v3538, %v3534
    %v3540 = vlaneseq
    %v3541 = vshrl.u32 %v3540, 7
    %v3542 = vsub.s32 %v2959, %v3541
    %v3543 = vrot.slane %v2908, %v3542
    %v3544 = vsel %vm2964, %v3543, %v3539
    %v3545 = vlaneseq
    %v3546 = vshrl.u32 %v3545, 7
    %v3547 = vsub.s32 %v2966, %v3546
    %v3548 = vrot.slane %v2911, %v3547
    %v3549 = vsel %vm2971, %v3548, %v3544
    %v3550 = vlaneseq
    %v3551 = vshrl.u32 %v3550, 7
    %v3552 = vsub.s32 %v2973, %v3551
    %v3553 = vrot.slane %v2914, %v3552
    %v3554 = vsel %vm2978, %v3553, %v3549
    %v3555 = vlaneseq
    %v3556 = vshrl.u32 %v3555, 7
    %v3557 = vsub.s32 %v2980, %v3556
    %v3558 = vrot.slane %v2917, %v3557
    %v3559 = vsel %vm2985, %v3558, %v3554
    %v3560 = vlaneseq
    %v3561 = vshrl.u32 %v3560, 7
    %v3562 = vsub.s32 %v2987, %v3561
    %v3563 = vrot.slane %v2920, %v3562
    %v3564 = vsel %vm2992, %v3563, %v3559
    %v3565 = vlaneseq
    %v3566 = vshrl.u32 %v3565, 7
    %v3567 = vsub.s32 %v2994, %v3566
    %v3568 = vrot.slane %v2923, %v3567
    %v3569 = vsel %vm2999, %v3568, %v3564
    %v3570 = vlaneseq
    %v3571 = vshrl.u32 %v3570, 7
    %v3572 = vsub.s32 %v3001, %v3571
    %v3573 = vrot.slane %v2926, %v3572
    %v3574 = vsel %vm3006, %v3573, %v3569
    %v3575 = vlaneseq
    %v3576 = vshrl.u32 %v3575, 7
    %v3577 = vsub.s32 %v3008, %v3576
    %v3578 = vrot.slane %v2929, %v3577
    %v3579 = vsel %vm3013, %v3578, %v3574
    %v3580 = vlaneseq
    %v3581 = vshrl.u32 %v3580, 7
    %v3582 = vsub.s32 %v3015, %v3581
    %v3583 = vrot.slane %v2932, %v3582
    %v3584 = vsel %vm3020, %v3583, %v3579
    %v3585 = vlaneseq
    %v3586 = vshrl.u32 %v3585, 7
    %v3587 = vsub.s32 %v3022, %v3586
    %v3588 = vrot.slane %v2935, %v3587
    %v3589 = vsel %vm3027, %v3588, %v3584
    %v3590 = vlaneseq
    %v3591 = vshrl.u32 %v3590, 7
    %v3592 = vsub.s32 %v3029, %v3591
    %v3593 = vrot.slane %v2938, %v3592
    %v3594 = vsel %vm3034, %v3593, %v3589
    %v3595 = vlaneseq
    %v3596 = vshrl.u32 %v3595, 7
    %v3597 = vsub.s32 %v3036, %v3596
    %v3598 = vrot.slane %v2941, %v3597
    %v3599 = vsel %vm3041, %v3598, %v3594
    %v3600 = vlaneseq
    %v3601 = vshrl.u32 %v3600, 7
    %v3602 = vsub.s32 %v3043, %v3601
    %v3603 = vrot.slane %v2944, %v3602
    %v3604 = vsel %vm3048, %v3603, %v3599
    %v3605 = vlaneseq
    %v3606 = vshrl.u32 %v3605, 7
    %v3607 = vsub.s32 %v3050, %v3606
    %v3608 = vrot.slane %v2947, %v3607
    %v3609 = vsel %vm3055, %v3608, %v3604
    %vm3610 = vcmask 1041409
    %v3611 = vsel %vm3610, %v3135, %v3056
    %vm3612 = vcmask 1042434
    %v3613 = vsel %vm3612, %v3214, %v3611
    %vm3614 = vcmask 1043459
    %v3615 = vsel %vm3614, %v3293, %v3613
    %vm3616 = vcmask 1044484
    %v3617 = vsel %vm3616, %v3372, %v3615
    %vm3618 = vcmask 1045509
    %v3619 = vsel %vm3618, %v3451, %v3617
    %vm3620 = vcmask 1046534
    %v3621 = vsel %vm3620, %v3530, %v3619
    %vm3622 = vcmask 1047559
    %v3623 = vsel %vm3622, %v3609, %v3621
    %3625 = vadd.xlane.f32.xlu0 %v3623
    %v3626 = vpop.xlane.xlu0 %3625
    %v3627 = vadd.f32 %v2435, %v3626
    %vm3628 = vcmask 7168
    %3629 = vst.msk [vmem:[#allocation2] sm:$0xff] %vm3628, %v3627
    %v3630 = vld [vmem:[#allocation3] sm:$0xff]
    %v3631 = vmul.f32 %v31, %v3623
    %3632 = vadd.xlane.f32.xlu0 %v3631
    %v3633 = vpop.xlane.xlu0 %3632
    %v3634 = vadd.f32 %v3630, %v3633
    %3635 = vst.msk [vmem:[#allocation3] sm:$0xff] %vm3628, %v3634
    // Predicated region
    $region14: #{tpu_custom_call.1} parent=1 // pred_check
      %p3636 = pneg %p20
    $region15: #{tpu_custom_call.1} parent=1 // pred_check_branch
      %3638 = sbr.rel (%p3636) target = $region17
    $region16: #{tpu_custom_call.1} parent=1 // pred_region
      %v3639 = vld [vmem:[#allocation3] sm:$0xff]
      %v3640 = vld [vmem:[#allocation4] sm:$0xff]
      %v3641 = vld [vmem:[#allocation2] sm:$0xff]
      %3643 = vset.pattern.permute.xlu0 0
      %3644 = vperm.xlu0 %3643, %v3641
      %v3645 = vpop.permute.xlu0 %3644
      %v3647 = vmul.f32 %v3640, %v3645
      %3649 = vset.pattern.permute.xlu0 0
      %3650 = vperm.xlu0 %3649, %v3639
      %v3651 = vpop.permute.xlu0 %3650
      %v3653 = vsub.f32 %v3651, %v3647
      %vm3654 = vcmp.lt.s32.totalorder %v2095, 16
      %v3655 = vsel %vm3654, %v3653, 0.0
      %v3656 = vmul.f32 %v3655, %v3655
      %3657 = vadd.xlane.f32.xlu0 %v3656
      %v3658 = vpop.xlane.xlu0 %3657
      %v3659 = vrsqrt.pop %v3658
      %v3660 = vmul.f32 %v3658, %v3659
      %vm3661 = vcmp.eq.f32.partialorder %v3658, inf
      %v3662 = vsel %vm3661, %v3658, %v3660
      %vm3663 = vcmp.eq.f32.partialorder %v3658, 0.0
      %v3664 = vand.u32 %v3658, 2147483648
      %v3665 = vsel %vm3663, %v3664, %v3662
      %3666 = vst.msk [vmem:[%s1] sm:$0xff] %vm3628, %v3665
    $region17: #{tpu_custom_call.1} parent=1 // pred_fallthru
      _
    // Predicated region
    $region18: #{tpu_custom_call.1} parent=1 // pred_check
      _
    $region19: #{tpu_custom_call.1} parent=1 // pred_check_branch
      %3668 = sbr.rel (0) target = $region21
    $region20: #{tpu_custom_call.1} parent=1 // pred_region
      _
    $region21: #{tpu_custom_call.1} parent=1 // pred_fallthru
      _
    // Predicated region
    $region22: #{tpu_custom_call.1} parent=1 // pred_check
      _
    $region23: #{tpu_custom_call.1} parent=1 // pred_check_branch
      %3670 = sbr.rel (0) target = $region25
    $region24: #{tpu_custom_call.1} parent=1 // pred_region
      _
    $region25: #{tpu_custom_call.1} parent=1 // pred_fallthru
      _
    %3671 = vsyncpa [#allocation5], 1

</llo_original>
